<compile_context>
chip_gen: v7x
topology: tpu7x:2x2x1
jax: 0.10.0
libtpu: 0.0.40
codegen_flags: <defaults>
</compile_context>

<pallas_src>
import functools

import jax
import jax.numpy as jnp
from jax import lax
from jax.experimental import pallas as pl
from jax.experimental.pallas import tpu as pltpu

LANES = 128  # TPU lane width: class axis is zero-padded to this for dense stores.


# ---------------------------------------------------------------------------
# Fused kernel: conv3x3(s=2,p=1) + bias + ReLU + 1x1 classifier + bilinear up
# ---------------------------------------------------------------------------
def _deeplab_fused_kernel(p00_ref, p01_ref, p10_ref, p11_ref,
                          wt_ref, bb_ref, wc_ref, bc_ref, kb_ref, o_ref,
                          *, hf, wf, c_in, c_feat):
    # Phase views of the padded input for this batch element (stride-2 conv):
    # phase (a, b) holds padded rows/cols congruent to (a, b) mod 2.
    ph = ((p00_ref[0], p01_ref[0]), (p10_ref[0], p11_ref[0]))   # each (hp, wp, c_in)

    # In-kernel "im2col": 9 shifted tap matmuls accumulated in f32 (never HBM).
    acc = jnp.zeros((hf * wf, c_feat), jnp.float32)
    for i in range(3):
        for j in range(3):
            src = ph[i % 2][j % 2]
            blk = src[i // 2:i // 2 + hf, j // 2:j // 2 + wf, :]     # (hf, wf, c_in)
            a = blk.reshape(hf * wf, c_in)                           # (hf*wf, c_in)
            acc = acc + jnp.dot(a, wt_ref[i * 3 + j],
                                preferred_element_type=jnp.float32)

    # Epilogue: bias + ReLU once (not per tap), then fused 1x1 classifier
    # against the VMEM-resident padded weight -> lane-dense (hf*wf, 128) logits.
    feat = jnp.maximum(acc + bb_ref[...], 0.0)                       # (hf*wf, c_feat)
    logits = jnp.dot(feat, wc_ref[...],
                     preferred_element_type=jnp.float32) + bc_ref[...]

    # Bilinear upsample (align_corners=False) as a single matmul with the
    # precomputed kron(Mh, Mw) interpolation matrix: (H*W, hf*wf) @ (hf*wf, 128).
    o_ref[...] = jnp.dot(kb_ref[...], logits,
                         preferred_element_type=jnp.float32).astype(o_ref.dtype)


def deeplab_fused_call(phases, w_taps, b_backbone, wc_pad, bc_pad, kb, hf, wf):
    p00, p01, p10, p11 = phases
    n, hp, wp, c_in = p00.shape
    c_feat = w_taps.shape[-1]
    out_hw = kb.shape[0]                                             # H*W output rows

    kernel = functools.partial(_deeplab_fused_kernel,
                               hf=hf, wf=wf, c_in=c_in, c_feat=c_feat)
    phase_spec = pl.BlockSpec((1, hp, wp, c_in), lambda b: (b, 0, 0, 0))
    return pl.pallas_call(
        kernel,
        out_shape=jax.ShapeDtypeStruct((n * out_hw, LANES), jnp.float32),
        grid=(n,),
        in_specs=[
            phase_spec, phase_spec, phase_spec, phase_spec,
            pl.BlockSpec((9, c_in, c_feat), lambda b: (0, 0, 0)),
            pl.BlockSpec((1, c_feat), lambda b: (0, 0)),
            pl.BlockSpec((c_feat, LANES), lambda b: (0, 0)),
            pl.BlockSpec((1, LANES), lambda b: (0, 0)),
            pl.BlockSpec((out_hw, hf * wf), lambda b: (0, 0)),
        ],
        out_specs=pl.BlockSpec((out_hw, LANES), lambda b: (b, 0)),
        compiler_params=pltpu.CompilerParams(
            dimension_semantics=("parallel",)),
    )(p00, p01, p10, p11, w_taps, b_backbone, wc_pad, bc_pad, kb)


# ---------------------------------------------------------------------------
# Parameter / index setup (wrapper-side, runs once per call)
# ---------------------------------------------------------------------------
def bilinear_matrix(out_size, in_size):
    """Interpolation matrix matching F.interpolate(bilinear, align_corners=False)."""
    scale = in_size / out_size
    dst = jnp.arange(out_size, dtype=jnp.float32)
    src = jnp.maximum(scale * (dst + 0.5) - 0.5, 0.0)   # PyTorch clamps src at 0
    i0 = jnp.clip(jnp.floor(src).astype(jnp.int32), 0, in_size - 1)
    i1 = jnp.minimum(i0 + 1, in_size - 1)
    w1 = src - i0.astype(jnp.float32)
    w0 = 1.0 - w1
    rows = jnp.arange(out_size)
    m = jnp.zeros((out_size, in_size), jnp.float32)
    m = m.at[rows, i0].add(w0)
    m = m.at[rows, i1].add(w1)
    return m


def init_params(c_in=4, c_feat=32, num_classes=8, kh=3, kw=3):
    k0, k1, k2, k3 = jax.random.split(jax.random.PRNGKey(42), 4)
    return {
        # PyTorch conv weight layout (Cout, Cin, kh, kw) kept for fidelity.
        "backbone_w": 0.1 * jax.random.normal(k0, (c_feat, c_in, kh, kw), jnp.float32),
        "backbone_b": 0.1 * jax.random.normal(k1, (c_feat,), jnp.float32),
        "cls_w": 0.1 * jax.random.normal(k2, (num_classes, c_feat, 1, 1), jnp.float32),
        "cls_b": 0.1 * jax.random.normal(k3, (num_classes,), jnp.float32),
    }


def deeplabv3_forward(x_nchw, params):
    N, c_in, H, W = x_nchw.shape
    assert H % 2 == 0 and W % 2 == 0

    bw = params["backbone_w"]                              # (c_feat, c_in, 3, 3)
    c_feat, _, kh, kw = bw.shape
    assert (kh, kw) == (3, 3)
    cw = params["cls_w"]                                   # (ncls, c_feat, 1, 1)
    num_classes = cw.shape[0]
    assert num_classes <= LANES
    hf, wf = H // 2, W // 2

    # ---- inputs: NHWC, pad=1, stride-2 phase decomposition (no 9x im2col) ----
    x = jnp.transpose(x_nchw, (0, 2, 3, 1)).astype(jnp.float32)
    xp = jnp.pad(x, ((0, 0), (1, 1), (1, 1), (0, 0)))
    phases = (xp[:, 0::2, 0::2, :], xp[:, 0::2, 1::2, :],
              xp[:, 1::2, 0::2, :], xp[:, 1::2, 1::2, :])

    # ---- weights: per-tap backbone matrices; classifier padded to 128 lanes ----
    w_taps = jnp.transpose(bw, (2, 3, 1, 0)).reshape(kh * kw, c_in, c_feat)
    b_backbone = params["backbone_b"].reshape(1, c_feat).astype(jnp.float32)
    wc = jnp.transpose(cw[:, :, 0, 0], (1, 0))             # (c_feat, ncls)
    wc_pad = jnp.zeros((c_feat, LANES), jnp.float32)
    wc_pad = wc_pad.at[:, :num_classes].set(wc)
    bc_pad = jnp.zeros((1, LANES), jnp.float32)
    bc_pad = bc_pad.at[:, :num_classes].set(params["cls_b"][None, :])

    # ---- precomputed separable bilinear matrix (align_corners=False) ----
    mh = bilinear_matrix(H, hf)                            # (H, hf)
    mw = bilinear_matrix(W, wf)                            # (W, wf)
    kb = jnp.kron(mh, mw)                                  # (H*W, hf*wf) f32

    # ---- single fused Pallas kernel ----
    up = deeplab_fused_call(phases, w_taps, b_backbone, wc_pad, bc_pad, kb, hf, wf)

    # ---- back to NCHW, drop the zero-padded class lanes ----
    up = up.reshape(N, H, W, LANES)[..., :num_classes]
    return jnp.transpose(up, (0, 3, 1, 2))


# ---------------------------------------------------------------------------
# Pure-JAX reference (XLA) for a correctness self-check
# ---------------------------------------------------------------------------
def reference_forward(x_nchw, params):
    x = x_nchw.astype(jnp.float32)
    feat = lax.conv_general_dilated(x, params["backbone_w"], (2, 2),
                                    ((1, 1), (1, 1)),
                                    dimension_numbers=("NCHW", "OIHW", "NCHW"))
    feat = jnp.maximum(feat + params["backbone_b"][None, :, None, None], 0.0)
    logits = lax.conv_general_dilated(feat, params["cls_w"], (1, 1),
                                      ((0, 0), (0, 0)),
                                      dimension_numbers=("NCHW", "OIHW", "NCHW"))
    logits = logits + params["cls_b"][None, :, None, None]
    H, W = x.shape[-2:]
    hf, wf = logits.shape[-2:]
    mh = bilinear_matrix(H, hf)
    mw = bilinear_matrix(W, wf)
    up = jnp.einsum("oh,nchw->ncow", mh, logits)
    up = jnp.einsum("pw,ncow->ncop", mw, up)
    return up


if __name__ == "__main__":
    key = jax.random.PRNGKey(0)
    x = jax.random.normal(key, (2, 4, 16, 16), jnp.float32)   # NCHW, like PyTorch

    params = init_params(c_in=4, c_feat=32, num_classes=8)

    fwd = jax.jit(deeplabv3_forward)
    out = fwd(x, params)
    out = jax.block_until_ready(out)

    assert out.shape == (2, 8, 16, 16), out.shape
    assert bool(jnp.all(jnp.isfinite(out)))

    ref = reference_forward(x, params)
    err = float(jnp.max(jnp.abs(out - ref)))
    assert err < 5e-3, f"max abs error vs reference: {err}"

    print("KERNEL_OK")
</pallas_src>

<mosaic_0001>
module attributes {stable_mosaic.version = 11 : i64} {
  func.func private @main(%arg0: i32) attributes {dimension_semantics = [#tpu.dimension_semantics<core_parallel>], iteration_bounds = array<i64: 2>, tpu.core_type = #tpu.core_type<sc_scalar_subcore>, window_params = []} {
    return
  }
}

module attributes {stable_mosaic.version = 11 : i64} {
  func.func private @main(%arg0: i32) attributes {dimension_semantics = [#tpu.dimension_semantics<core_parallel>], iteration_bounds = array<i64: 2>, tpu.core_type = #tpu.core_type<sc_scalar_subcore>, window_params = []} {
    return
  }
}

module attributes {stable_mosaic.version = 11 : i64} {
  func.func @_deeplab_fused_kernel(%arg0: i32, %arg1: memref<1x9x9x4xf32, #tpu.memory_space<vmem>>, %arg2: memref<1x9x9x4xf32, #tpu.memory_space<vmem>>, %arg3: memref<1x9x9x4xf32, #tpu.memory_space<vmem>>, %arg4: memref<1x9x9x4xf32, #tpu.memory_space<vmem>>, %arg5: memref<9x4x32xf32, #tpu.memory_space<vmem>>, %arg6: memref<1x32xf32, #tpu.memory_space<vmem>>, %arg7: memref<32x128xf32, #tpu.memory_space<vmem>>, %arg8: memref<1x128xf32, #tpu.memory_space<vmem>>, %arg9: memref<256x64xf32, #tpu.memory_space<vmem>>, %arg10: memref<256x128xf32, #tpu.memory_space<vmem>>) attributes {dimension_semantics = [#tpu.dimension_semantics<parallel>], iteration_bounds = array<i64: 2>, scalar_prefetch = 0 : i64, scratch_operands = 0 : i64, tpu.core_type = #tpu.core_type<tc>, window_params = [{transform_indices = @transform_0, window_bounds = array<i64: 1, 9, 9, 4>}, {transform_indices = @transform_1, window_bounds = array<i64: 1, 9, 9, 4>}, {transform_indices = @transform_2, window_bounds = array<i64: 1, 9, 9, 4>}, {transform_indices = @transform_3, window_bounds = array<i64: 1, 9, 9, 4>}, {pipeline_mode = #tpu.pipeline_mode<synchronous>, transform_indices = @transform_4, window_bounds = array<i64: 9, 4, 32>}, {pipeline_mode = #tpu.pipeline_mode<synchronous>, transform_indices = @transform_5, window_bounds = array<i64: 1, 32>}, {pipeline_mode = #tpu.pipeline_mode<synchronous>, transform_indices = @transform_6, window_bounds = array<i64: 32, 128>}, {pipeline_mode = #tpu.pipeline_mode<synchronous>, transform_indices = @transform_7, window_bounds = array<i64: 1, 128>}, {pipeline_mode = #tpu.pipeline_mode<synchronous>, transform_indices = @transform_8, window_bounds = array<i64: 256, 64>}, {transform_indices = @transform_9, window_bounds = array<i64: 256, 128>}]} {
    %c0 = arith.constant 0 : index
    %c0_0 = arith.constant 0 : index
    %c0_1 = arith.constant 0 : index
    %c0_2 = arith.constant 0 : index
    %0 = vector.load %arg1[%c0, %c0_0, %c0_1, %c0_2] : memref<1x9x9x4xf32, #tpu.memory_space<vmem>>, vector<1x9x9x4xf32>
    %1 = vector.shape_cast %0 : vector<1x9x9x4xf32> to vector<9x9x4xf32>
    %c0_3 = arith.constant 0 : index
    %c0_4 = arith.constant 0 : index
    %c0_5 = arith.constant 0 : index
    %c0_6 = arith.constant 0 : index
    %2 = vector.load %arg2[%c0_3, %c0_4, %c0_5, %c0_6] : memref<1x9x9x4xf32, #tpu.memory_space<vmem>>, vector<1x9x9x4xf32>
    %3 = vector.shape_cast %2 : vector<1x9x9x4xf32> to vector<9x9x4xf32>
    %c0_7 = arith.constant 0 : index
    %c0_8 = arith.constant 0 : index
    %c0_9 = arith.constant 0 : index
    %c0_10 = arith.constant 0 : index
    %4 = vector.load %arg3[%c0_7, %c0_8, %c0_9, %c0_10] : memref<1x9x9x4xf32, #tpu.memory_space<vmem>>, vector<1x9x9x4xf32>
    %5 = vector.shape_cast %4 : vector<1x9x9x4xf32> to vector<9x9x4xf32>
    %c0_11 = arith.constant 0 : index
    %c0_12 = arith.constant 0 : index
    %c0_13 = arith.constant 0 : index
    %c0_14 = arith.constant 0 : index
    %6 = vector.load %arg4[%c0_11, %c0_12, %c0_13, %c0_14] : memref<1x9x9x4xf32, #tpu.memory_space<vmem>>, vector<1x9x9x4xf32>
    %7 = vector.shape_cast %6 : vector<1x9x9x4xf32> to vector<9x9x4xf32>
    %cst = arith.constant 0.000000e+00 : f32
    %8 = vector.broadcast %cst : f32 to vector<64x32xf32>
    %9 = vector.extract_strided_slice %1 {offsets = [0, 0, 0], sizes = [8, 8, 4], strides = [1, 1, 1]} : vector<9x9x4xf32> to vector<8x8x4xf32>
    %10 = vector.shape_cast %9 : vector<8x8x4xf32> to vector<64x4xf32>
    %c0_15 = arith.constant 0 : index
    %c0_16 = arith.constant 0 : index
    %c0_17 = arith.constant 0 : index
    %11 = vector.load %arg5[%c0_15, %c0_16, %c0_17] : memref<9x4x32xf32, #tpu.memory_space<vmem>>, vector<1x4x32xf32>
    %12 = vector.shape_cast %11 : vector<1x4x32xf32> to vector<4x32xf32>
    %cst_18 = arith.constant dense<0.000000e+00> : vector<64x32xf32>
    %13 = tpu.matmul %10, %12, %cst_18 {dimension_numbers = #tpu.dot_dimension_numbers<[1], [0], [0], [1], [0, 0, 1, 1], [], []>} : vector<64x4xf32>, vector<4x32xf32>, vector<64x32xf32> -> vector<64x32xf32>
    %14 = arith.addf %8, %13 : vector<64x32xf32>
    %15 = vector.extract_strided_slice %3 {offsets = [0, 0, 0], sizes = [8, 8, 4], strides = [1, 1, 1]} : vector<9x9x4xf32> to vector<8x8x4xf32>
    %16 = vector.shape_cast %15 : vector<8x8x4xf32> to vector<64x4xf32>
    %c1 = arith.constant 1 : index
    %c0_19 = arith.constant 0 : index
    %c0_20 = arith.constant 0 : index
    %17 = vector.load %arg5[%c1, %c0_19, %c0_20] : memref<9x4x32xf32, #tpu.memory_space<vmem>>, vector<1x4x32xf32>
    %18 = vector.shape_cast %17 : vector<1x4x32xf32> to vector<4x32xf32>
    %cst_21 = arith.constant dense<0.000000e+00> : vector<64x32xf32>
    %19 = tpu.matmul %16, %18, %cst_21 {dimension_numbers = #tpu.dot_dimension_numbers<[1], [0], [0], [1], [0, 0, 1, 1], [], []>} : vector<64x4xf32>, vector<4x32xf32>, vector<64x32xf32> -> vector<64x32xf32>
    %20 = arith.addf %14, %19 : vector<64x32xf32>
    %21 = vector.extract_strided_slice %1 {offsets = [0, 1, 0], sizes = [8, 8, 4], strides = [1, 1, 1]} : vector<9x9x4xf32> to vector<8x8x4xf32>
    %22 = vector.shape_cast %21 : vector<8x8x4xf32> to vector<64x4xf32>
    %c2 = arith.constant 2 : index
    %c0_22 = arith.constant 0 : index
    %c0_23 = arith.constant 0 : index
    %23 = vector.load %arg5[%c2, %c0_22, %c0_23] : memref<9x4x32xf32, #tpu.memory_space<vmem>>, vector<1x4x32xf32>
    %24 = vector.shape_cast %23 : vector<1x4x32xf32> to vector<4x32xf32>
    %cst_24 = arith.constant dense<0.000000e+00> : vector<64x32xf32>
    %25 = tpu.matmul %22, %24, %cst_24 {dimension_numbers = #tpu.dot_dimension_numbers<[1], [0], [0], [1], [0, 0, 1, 1], [], []>} : vector<64x4xf32>, vector<4x32xf32>, vector<64x32xf32> -> vector<64x32xf32>
    %26 = arith.addf %20, %25 : vector<64x32xf32>
    %27 = vector.extract_strided_slice %5 {offsets = [0, 0, 0], sizes = [8, 8, 4], strides = [1, 1, 1]} : vector<9x9x4xf32> to vector<8x8x4xf32>
    %28 = vector.shape_cast %27 : vector<8x8x4xf32> to vector<64x4xf32>
    %c3 = arith.constant 3 : index
    %c0_25 = arith.constant 0 : index
    %c0_26 = arith.constant 0 : index
    %29 = vector.load %arg5[%c3, %c0_25, %c0_26] : memref<9x4x32xf32, #tpu.memory_space<vmem>>, vector<1x4x32xf32>
    %30 = vector.shape_cast %29 : vector<1x4x32xf32> to vector<4x32xf32>
    %cst_27 = arith.constant dense<0.000000e+00> : vector<64x32xf32>
    %31 = tpu.matmul %28, %30, %cst_27 {dimension_numbers = #tpu.dot_dimension_numbers<[1], [0], [0], [1], [0, 0, 1, 1], [], []>} : vector<64x4xf32>, vector<4x32xf32>, vector<64x32xf32> -> vector<64x32xf32>
    %32 = arith.addf %26, %31 : vector<64x32xf32>
    %33 = vector.extract_strided_slice %7 {offsets = [0, 0, 0], sizes = [8, 8, 4], strides = [1, 1, 1]} : vector<9x9x4xf32> to vector<8x8x4xf32>
    %34 = vector.shape_cast %33 : vector<8x8x4xf32> to vector<64x4xf32>
    %c4 = arith.constant 4 : index
    %c0_28 = arith.constant 0 : index
    %c0_29 = arith.constant 0 : index
    %35 = vector.load %arg5[%c4, %c0_28, %c0_29] : memref<9x4x32xf32, #tpu.memory_space<vmem>>, vector<1x4x32xf32>
    %36 = vector.shape_cast %35 : vector<1x4x32xf32> to vector<4x32xf32>
    %cst_30 = arith.constant dense<0.000000e+00> : vector<64x32xf32>
    %37 = tpu.matmul %34, %36, %cst_30 {dimension_numbers = #tpu.dot_dimension_numbers<[1], [0], [0], [1], [0, 0, 1, 1], [], []>} : vector<64x4xf32>, vector<4x32xf32>, vector<64x32xf32> -> vector<64x32xf32>
    %38 = arith.addf %32, %37 : vector<64x32xf32>
    %39 = vector.extract_strided_slice %5 {offsets = [0, 1, 0], sizes = [8, 8, 4], strides = [1, 1, 1]} : vector<9x9x4xf32> to vector<8x8x4xf32>
    %40 = vector.shape_cast %39 : vector<8x8x4xf32> to vector<64x4xf32>
    %c5 = arith.constant 5 : index
    %c0_31 = arith.constant 0 : index
    %c0_32 = arith.constant 0 : index
    %41 = vector.load %arg5[%c5, %c0_31, %c0_32] : memref<9x4x32xf32, #tpu.memory_space<vmem>>, vector<1x4x32xf32>
    %42 = vector.shape_cast %41 : vector<1x4x32xf32> to vector<4x32xf32>
    %cst_33 = arith.constant dense<0.000000e+00> : vector<64x32xf32>
    %43 = tpu.matmul %40, %42, %cst_33 {dimension_numbers = #tpu.dot_dimension_numbers<[1], [0], [0], [1], [0, 0, 1, 1], [], []>} : vector<64x4xf32>, vector<4x32xf32>, vector<64x32xf32> -> vector<64x32xf32>
    %44 = arith.addf %38, %43 : vector<64x32xf32>
    %45 = vector.extract_strided_slice %1 {offsets = [1, 0, 0], sizes = [8, 8, 4], strides = [1, 1, 1]} : vector<9x9x4xf32> to vector<8x8x4xf32>
    %46 = vector.shape_cast %45 : vector<8x8x4xf32> to vector<64x4xf32>
    %c6 = arith.constant 6 : index
    %c0_34 = arith.constant 0 : index
    %c0_35 = arith.constant 0 : index
    %47 = vector.load %arg5[%c6, %c0_34, %c0_35] : memref<9x4x32xf32, #tpu.memory_space<vmem>>, vector<1x4x32xf32>
    %48 = vector.shape_cast %47 : vector<1x4x32xf32> to vector<4x32xf32>
    %cst_36 = arith.constant dense<0.000000e+00> : vector<64x32xf32>
    %49 = tpu.matmul %46, %48, %cst_36 {dimension_numbers = #tpu.dot_dimension_numbers<[1], [0], [0], [1], [0, 0, 1, 1], [], []>} : vector<64x4xf32>, vector<4x32xf32>, vector<64x32xf32> -> vector<64x32xf32>
    %50 = arith.addf %44, %49 : vector<64x32xf32>
    %51 = vector.extract_strided_slice %3 {offsets = [1, 0, 0], sizes = [8, 8, 4], strides = [1, 1, 1]} : vector<9x9x4xf32> to vector<8x8x4xf32>
    %52 = vector.shape_cast %51 : vector<8x8x4xf32> to vector<64x4xf32>
    %c7 = arith.constant 7 : index
    %c0_37 = arith.constant 0 : index
    %c0_38 = arith.constant 0 : index
    %53 = vector.load %arg5[%c7, %c0_37, %c0_38] : memref<9x4x32xf32, #tpu.memory_space<vmem>>, vector<1x4x32xf32>
    %54 = vector.shape_cast %53 : vector<1x4x32xf32> to vector<4x32xf32>
    %cst_39 = arith.constant dense<0.000000e+00> : vector<64x32xf32>
    %55 = tpu.matmul %52, %54, %cst_39 {dimension_numbers = #tpu.dot_dimension_numbers<[1], [0], [0], [1], [0, 0, 1, 1], [], []>} : vector<64x4xf32>, vector<4x32xf32>, vector<64x32xf32> -> vector<64x32xf32>
    %56 = arith.addf %50, %55 : vector<64x32xf32>
    %57 = vector.extract_strided_slice %1 {offsets = [1, 1, 0], sizes = [8, 8, 4], strides = [1, 1, 1]} : vector<9x9x4xf32> to vector<8x8x4xf32>
    %58 = vector.shape_cast %57 : vector<8x8x4xf32> to vector<64x4xf32>
    %c8 = arith.constant 8 : index
    %c0_40 = arith.constant 0 : index
    %c0_41 = arith.constant 0 : index
    %59 = vector.load %arg5[%c8, %c0_40, %c0_41] : memref<9x4x32xf32, #tpu.memory_space<vmem>>, vector<1x4x32xf32>
    %60 = vector.shape_cast %59 : vector<1x4x32xf32> to vector<4x32xf32>
    %cst_42 = arith.constant dense<0.000000e+00> : vector<64x32xf32>
    %61 = tpu.matmul %58, %60, %cst_42 {dimension_numbers = #tpu.dot_dimension_numbers<[1], [0], [0], [1], [0, 0, 1, 1], [], []>} : vector<64x4xf32>, vector<4x32xf32>, vector<64x32xf32> -> vector<64x32xf32>
    %62 = arith.addf %56, %61 : vector<64x32xf32>
    %c0_43 = arith.constant 0 : index
    %c0_44 = arith.constant 0 : index
    %63 = vector.load %arg6[%c0_43, %c0_44] : memref<1x32xf32, #tpu.memory_space<vmem>>, vector<1x32xf32>
    %64 = vector.broadcast %63 : vector<1x32xf32> to vector<64x32xf32>
    %65 = arith.addf %62, %64 : vector<64x32xf32>
    %cst_45 = arith.constant 0.000000e+00 : f32
    %66 = vector.broadcast %cst_45 : f32 to vector<64x32xf32>
    %67 = arith.maximumf %65, %66 : vector<64x32xf32>
    %c0_46 = arith.constant 0 : index
    %c0_47 = arith.constant 0 : index
    %68 = vector.load %arg7[%c0_46, %c0_47] : memref<32x128xf32, #tpu.memory_space<vmem>>, vector<32x128xf32>
    %cst_48 = arith.constant dense<0.000000e+00> : vector<64x128xf32>
    %69 = tpu.matmul %67, %68, %cst_48 {dimension_numbers = #tpu.dot_dimension_numbers<[1], [0], [0], [1], [0, 0, 1, 1], [], []>} : vector<64x32xf32>, vector<32x128xf32>, vector<64x128xf32> -> vector<64x128xf32>
    %c0_49 = arith.constant 0 : index
    %c0_50 = arith.constant 0 : index
    %70 = vector.load %arg8[%c0_49, %c0_50] : memref<1x128xf32, #tpu.memory_space<vmem>>, vector<1x128xf32>
    %71 = vector.broadcast %70 : vector<1x128xf32> to vector<64x128xf32>
    %72 = arith.addf %69, %71 : vector<64x128xf32>
    %c0_51 = arith.constant 0 : index
    %c0_52 = arith.constant 0 : index
    %73 = vector.load %arg9[%c0_51, %c0_52] : memref<256x64xf32, #tpu.memory_space<vmem>>, vector<256x64xf32>
    %cst_53 = arith.constant dense<0.000000e+00> : vector<256x128xf32>
    %74 = tpu.matmul %73, %72, %cst_53 {dimension_numbers = #tpu.dot_dimension_numbers<[1], [0], [0], [1], [0, 0, 1, 1], [], []>} : vector<256x64xf32>, vector<64x128xf32>, vector<256x128xf32> -> vector<256x128xf32>
    %c0_54 = arith.constant 0 : index
    %c0_55 = arith.constant 0 : index
    %75 = vector.load %arg10[%c0_54, %c0_55] : memref<256x128xf32, #tpu.memory_space<vmem>>, vector<256x128xf32>
    tpu.vector_store %arg10[%c0_54, %c0_55], %74 {strides = array<i32>} : memref<256x128xf32, #tpu.memory_space<vmem>>, vector<256x128xf32>,
    return
  }
  func.func @transform_0(%arg0: i32) -> (i32, i32, i32, i32) {
    %c0_i32 = arith.constant 0 : i32
    %c0_i32_0 = arith.constant 0 : i32
    %c0_i32_1 = arith.constant 0 : i32
    %c0_i32_2 = arith.constant 0 : i32
    return %arg0, %c0_i32, %c0_i32_0, %c0_i32_1 : i32, i32, i32, i32
  }
  func.func @transform_1(%arg0: i32) -> (i32, i32, i32, i32) {
    %c0_i32 = arith.constant 0 : i32
    %c0_i32_0 = arith.constant 0 : i32
    %c0_i32_1 = arith.constant 0 : i32
    %c0_i32_2 = arith.constant 0 : i32
    return %arg0, %c0_i32, %c0_i32_0, %c0_i32_1 : i32, i32, i32, i32
  }
  func.func @transform_2(%arg0: i32) -> (i32, i32, i32, i32) {
    %c0_i32 = arith.constant 0 : i32
    %c0_i32_0 = arith.constant 0 : i32
    %c0_i32_1 = arith.constant 0 : i32
    %c0_i32_2 = arith.constant 0 : i32
    return %arg0, %c0_i32, %c0_i32_0, %c0_i32_1 : i32, i32, i32, i32
  }
  func.func @transform_3(%arg0: i32) -> (i32, i32, i32, i32) {
    %c0_i32 = arith.constant 0 : i32
    %c0_i32_0 = arith.constant 0 : i32
    %c0_i32_1 = arith.constant 0 : i32
    %c0_i32_2 = arith.constant 0 : i32
    return %arg0, %c0_i32, %c0_i32_0, %c0_i32_1 : i32, i32, i32, i32
  }
  func.func @transform_4(%arg0: i32) -> (i32, i32, i32) {
    %c0_i32 = arith.constant 0 : i32
    %c0_i32_0 = arith.constant 0 : i32
    %c0_i32_1 = arith.constant 0 : i32
    %c0_i32_2 = arith.constant 0 : i32
    return %c0_i32, %c0_i32_0, %c0_i32_1 : i32, i32, i32
  }
  func.func @transform_5(%arg0: i32) -> (i32, i32) {
    %c0_i32 = arith.constant 0 : i32
    %c0_i32_0 = arith.constant 0 : i32
    %c0_i32_1 = arith.constant 0 : i32
    return %c0_i32, %c0_i32_0 : i32, i32
  }
  func.func @transform_6(%arg0: i32) -> (i32, i32) {
    %c0_i32 = arith.constant 0 : i32
    %c0_i32_0 = arith.constant 0 : i32
    %c0_i32_1 = arith.constant 0 : i32
    return %c0_i32, %c0_i32_0 : i32, i32
  }
  func.func @transform_7(%arg0: i32) -> (i32, i32) {
    %c0_i32 = arith.constant 0 : i32
    %c0_i32_0 = arith.constant 0 : i32
    %c0_i32_1 = arith.constant 0 : i32
    return %c0_i32, %c0_i32_0 : i32, i32
  }
  func.func @transform_8(%arg0: i32) -> (i32, i32) {
    %c0_i32 = arith.constant 0 : i32
    %c0_i32_0 = arith.constant 0 : i32
    %c0_i32_1 = arith.constant 0 : i32
    return %c0_i32, %c0_i32_0 : i32, i32
  }
  func.func @transform_9(%arg0: i32) -> (i32, i32) {
    %c0_i32 = arith.constant 0 : i32
    %c0_i32_0 = arith.constant 0 : i32
    return %arg0, %c0_i32 : i32, i32
  }
}

</mosaic_0001>

<llo_original>
// kernel: deeplabv3_forward.1
$region0: #{deeplabv3_forward.1}
  #allocation0 [shape = 'u32[]', space=smem, size = 0x4, offset = 0x4, fixed_abs, tag = 'smem constant byte address 0x4 - core index']
  #allocation1 [shape = 'u32[144,128]{1,0:T(1,128)}', space=vmem, size = 0x12000, scoped, tag = 'internal scratch']
  %s0 = inlined_call_operand.vmem [shape: f32[2,9,9,4], index: 0, kind: input, shape index: {}]
  %s1 = inlined_call_operand.vmem [shape: f32[2,9,9,4], index: 1, kind: input, shape index: {}]
  %s2 = inlined_call_operand.vmem [shape: f32[2,9,9,4], index: 2, kind: input, shape index: {}]
  %s3 = inlined_call_operand.vmem [shape: f32[2,9,9,4], index: 3, kind: input, shape index: {}]
  %s4 = inlined_call_operand.vmem [shape: f32[9,4,32], index: 4, kind: input, shape index: {}]
  %s5 = inlined_call_operand.vmem [shape: f32[1,32], index: 5, kind: input, shape index: {}]
  %s6 = inlined_call_operand.vmem [shape: f32[32,128], index: 6, kind: input, shape index: {}]
  %s7 = inlined_call_operand.vmem [shape: f32[1,128], index: 7, kind: input, shape index: {}]
  %s8 = inlined_call_operand.vmem [shape: f32[256,64], index: 8, kind: input, shape index: {}]
  %s9 = inlined_call_operand.vmem [shape: f32[512,128], index: 9, kind: output, shape index: {}]
  %s10 = sld [smem:[#allocation0]]
  $region69: #{deeplabv3_forward.1} parent=0
    _
  %s12 = ssub.s32 1, %s10
  %s13 = scalar_select 0, %s12, %s10
  loop: start=0, step=1, limit=4
  $region2: #{deeplabv3_forward.1} parent=0 // loop_pre_header
    _
  $region3: #{deeplabv3_forward.1} parent=0 // loop_header
    %s15 = sphi 0, %s19
    %p16 = scmp.ge.s32.totalorder %s15, 4
    %s25 = sphi 0, %s27
    %s28 = sphi 0, %s25
    %s29 = sphi 0, %s28
    %s45 = sphi 0, %s29
    %s51 = sphi 0, %s53
    %s54 = sphi 0, %s51
    %s55 = sphi 0, %s54
    %s71 = sphi 0, %s55
    %s77 = sphi 0, %s79
    %s80 = sphi 0, %s77
    %s81 = sphi 0, %s80
    %s97 = sphi 0, %s81
    %s103 = sphi 0, %s105
    %s106 = sphi 0, %s103
    %s107 = sphi 0, %s106
    %s123 = sphi 0, %s107
    %s127 = sphi 0, %s127
    %s129 = sphi 0, %s127
    %s130 = sphi 0, %s129
    %s144 = sphi 0, %s130
    %s148 = sphi 0, %s148
    %s150 = sphi 0, %s148
    %s151 = sphi 0, %s150
    %s165 = sphi 0, %s151
    %s169 = sphi 0, %s169
    %s171 = sphi 0, %s169
    %s172 = sphi 0, %s171
    %s186 = sphi 0, %s172
    %s190 = sphi 0, %s190
    %s192 = sphi 0, %s190
    %s193 = sphi 0, %s192
    %s207 = sphi 0, %s193
    %s211 = sphi 0, %s211
    %s213 = sphi 0, %s211
    %s214 = sphi 0, %s213
    %s228 = sphi 0, %s214
    %s234 = sphi 0, %s236
    %s237 = sphi 0, %s234
    %s238 = sphi 0, %s237
    %s254 = sphi 0, %s238
  $region4: #{deeplabv3_forward.1} parent=0 // loop_header_branch
    %18 = sbr.rel (%p16) target = $region8
  $region5: #{deeplabv3_forward.1} parent=0 // loop_body
    %s20 = ssub.s32 %s15, 1
    %s21 = ssub.s32 %s15, 2
    %s22 = sadd.s32 %s15, 1
    %s23 = ssub.s32 %s15, %s22
    %p24 = scmp.eq.s32.totalorder %s23, 0
    %s26 = sadd.s32 %s25, 1
    %s27 = scalar_select %p24, %s25, %s26
    %p30 = pneg %p24
    %p31 = scmp.eq.s32.totalorder %s15, 1
    %p32 = por %p30, %p31
    %p33 = scmp.ne.s32.totalorder %s25, %s28
    %p34 = scmp.eq.s32.totalorder %s15, 0
    %p35 = por %p33, %p34
    %p36 = scmp.ne.s32.totalorder %s25, %s28
    %p37 = scmp.eq.s32.totalorder %s20, 1
    %p38 = por %p36, %p37
    %p39 = scmp.ne.s32.totalorder %s28, %s29
    %p40 = scmp.eq.s32.totalorder %s20, 0
    %p41 = por %p39, %p40
    %p42 = scmp.ne.s32.totalorder %s28, %s29
    %p43 = scmp.eq.s32.totalorder %s21, 1
    %p44 = por %p42, %p43
    %p46 = scmp.ne.s32.totalorder %s29, %s45
    %p47 = scmp.eq.s32.totalorder %s21, 0
    %p48 = por %p46, %p47
    %s49 = ssub.s32 %s15, %s22
    %p50 = scmp.eq.s32.totalorder %s49, 0
    %s52 = sadd.s32 %s51, 1
    %s53 = scalar_select %p50, %s51, %s52
    %p56 = pneg %p50
    %p57 = scmp.eq.s32.totalorder %s15, 1
    %p58 = por %p56, %p57
    %p59 = scmp.ne.s32.totalorder %s51, %s54
    %p60 = scmp.eq.s32.totalorder %s15, 0
    %p61 = por %p59, %p60
    %p62 = scmp.ne.s32.totalorder %s51, %s54
    %p63 = scmp.eq.s32.totalorder %s20, 1
    %p64 = por %p62, %p63
    %p65 = scmp.ne.s32.totalorder %s54, %s55
    %p66 = scmp.eq.s32.totalorder %s20, 0
    %p67 = por %p65, %p66
    %p68 = scmp.ne.s32.totalorder %s54, %s55
    %p69 = scmp.eq.s32.totalorder %s21, 1
    %p70 = por %p68, %p69
    %p72 = scmp.ne.s32.totalorder %s55, %s71
    %p73 = scmp.eq.s32.totalorder %s21, 0
    %p74 = por %p72, %p73
    %s75 = ssub.s32 %s15, %s22
    %p76 = scmp.eq.s32.totalorder %s75, 0
    %s78 = sadd.s32 %s77, 1
    %s79 = scalar_select %p76, %s77, %s78
    %p82 = pneg %p76
    %p83 = scmp.eq.s32.totalorder %s15, 1
    %p84 = por %p82, %p83
    %p85 = scmp.ne.s32.totalorder %s77, %s80
    %p86 = scmp.eq.s32.totalorder %s15, 0
    %p87 = por %p85, %p86
    %p88 = scmp.ne.s32.totalorder %s77, %s80
    %p89 = scmp.eq.s32.totalorder %s20, 1
    %p90 = por %p88, %p89
    %p91 = scmp.ne.s32.totalorder %s80, %s81
    %p92 = scmp.eq.s32.totalorder %s20, 0
    %p93 = por %p91, %p92
    %p94 = scmp.ne.s32.totalorder %s80, %s81
    %p95 = scmp.eq.s32.totalorder %s21, 1
    %p96 = por %p94, %p95
    %p98 = scmp.ne.s32.totalorder %s81, %s97
    %p99 = scmp.eq.s32.totalorder %s21, 0
    %p100 = por %p98, %p99
    %s101 = ssub.s32 %s15, %s22
    %p102 = scmp.eq.s32.totalorder %s101, 0
    %s104 = sadd.s32 %s103, 1
    %s105 = scalar_select %p102, %s103, %s104
    %p108 = pneg %p102
    %p109 = scmp.eq.s32.totalorder %s15, 1
    %p110 = por %p108, %p109
    %p111 = scmp.ne.s32.totalorder %s103, %s106
    %p112 = scmp.eq.s32.totalorder %s15, 0
    %p113 = por %p111, %p112
    %p114 = scmp.ne.s32.totalorder %s103, %s106
    %p115 = scmp.eq.s32.totalorder %s20, 1
    %p116 = por %p114, %p115
    %p117 = scmp.ne.s32.totalorder %s106, %s107
    %p118 = scmp.eq.s32.totalorder %s20, 0
    %p119 = por %p117, %p118
    %p120 = scmp.ne.s32.totalorder %s106, %s107
    %p121 = scmp.eq.s32.totalorder %s21, 1
    %p122 = por %p120, %p121
    %p124 = scmp.ne.s32.totalorder %s107, %s123
    %p125 = scmp.eq.s32.totalorder %s21, 0
    %p126 = por %p124, %p125
    %s128 = sadd.s32 %s127, 1
    %p131 = scmp.eq.s32.totalorder %s15, 1
    %p132 = scmp.ne.s32.totalorder %s127, %s129
    %p133 = scmp.eq.s32.totalorder %s15, 0
    %p134 = por %p132, %p133
    %p135 = scmp.ne.s32.totalorder %s127, %s129
    %p136 = scmp.eq.s32.totalorder %s20, 1
    %p137 = por %p135, %p136
    %p138 = scmp.ne.s32.totalorder %s129, %s130
    %p139 = scmp.eq.s32.totalorder %s20, 0
    %p140 = por %p138, %p139
    %p141 = scmp.ne.s32.totalorder %s129, %s130
    %p142 = scmp.eq.s32.totalorder %s21, 1
    %p143 = por %p141, %p142
    %p145 = scmp.ne.s32.totalorder %s130, %s144
    %p146 = scmp.eq.s32.totalorder %s21, 0
    %p147 = por %p145, %p146
    %s149 = sadd.s32 %s148, 1
    %p152 = scmp.eq.s32.totalorder %s15, 1
    %p153 = scmp.ne.s32.totalorder %s148, %s150
    %p154 = scmp.eq.s32.totalorder %s15, 0
    %p155 = por %p153, %p154
    %p156 = scmp.ne.s32.totalorder %s148, %s150
    %p157 = scmp.eq.s32.totalorder %s20, 1
    %p158 = por %p156, %p157
    %p159 = scmp.ne.s32.totalorder %s150, %s151
    %p160 = scmp.eq.s32.totalorder %s20, 0
    %p161 = por %p159, %p160
    %p162 = scmp.ne.s32.totalorder %s150, %s151
    %p163 = scmp.eq.s32.totalorder %s21, 1
    %p164 = por %p162, %p163
    %p166 = scmp.ne.s32.totalorder %s151, %s165
    %p167 = scmp.eq.s32.totalorder %s21, 0
    %p168 = por %p166, %p167
    %s170 = sadd.s32 %s169, 1
    %p173 = scmp.eq.s32.totalorder %s15, 1
    %p174 = scmp.ne.s32.totalorder %s169, %s171
    %p175 = scmp.eq.s32.totalorder %s15, 0
    %p176 = por %p174, %p175
    %p177 = scmp.ne.s32.totalorder %s169, %s171
    %p178 = scmp.eq.s32.totalorder %s20, 1
    %p179 = por %p177, %p178
    %p180 = scmp.ne.s32.totalorder %s171, %s172
    %p181 = scmp.eq.s32.totalorder %s20, 0
    %p182 = por %p180, %p181
    %p183 = scmp.ne.s32.totalorder %s171, %s172
    %p184 = scmp.eq.s32.totalorder %s21, 1
    %p185 = por %p183, %p184
    %p187 = scmp.ne.s32.totalorder %s172, %s186
    %p188 = scmp.eq.s32.totalorder %s21, 0
    %p189 = por %p187, %p188
    %s191 = sadd.s32 %s190, 1
    %p194 = scmp.eq.s32.totalorder %s15, 1
    %p195 = scmp.ne.s32.totalorder %s190, %s192
    %p196 = scmp.eq.s32.totalorder %s15, 0
    %p197 = por %p195, %p196
    %p198 = scmp.ne.s32.totalorder %s190, %s192
    %p199 = scmp.eq.s32.totalorder %s20, 1
    %p200 = por %p198, %p199
    %p201 = scmp.ne.s32.totalorder %s192, %s193
    %p202 = scmp.eq.s32.totalorder %s20, 0
    %p203 = por %p201, %p202
    %p204 = scmp.ne.s32.totalorder %s192, %s193
    %p205 = scmp.eq.s32.totalorder %s21, 1
    %p206 = por %p204, %p205
    %p208 = scmp.ne.s32.totalorder %s193, %s207
    %p209 = scmp.eq.s32.totalorder %s21, 0
    %p210 = por %p208, %p209
    %s212 = sadd.s32 %s211, 1
    %p215 = scmp.eq.s32.totalorder %s15, 1
    %p216 = scmp.ne.s32.totalorder %s211, %s213
    %p217 = scmp.eq.s32.totalorder %s15, 0
    %p218 = por %p216, %p217
    %p219 = scmp.ne.s32.totalorder %s211, %s213
    %p220 = scmp.eq.s32.totalorder %s20, 1
    %p221 = por %p219, %p220
    %p222 = scmp.ne.s32.totalorder %s213, %s214
    %p223 = scmp.eq.s32.totalorder %s20, 0
    %p224 = por %p222, %p223
    %p225 = scmp.ne.s32.totalorder %s213, %s214
    %p226 = scmp.eq.s32.totalorder %s21, 1
    %p227 = por %p225, %p226
    %p229 = scmp.ne.s32.totalorder %s214, %s228
    %p230 = scmp.eq.s32.totalorder %s21, 0
    %p231 = por %p229, %p230
    %s232 = ssub.s32 %s15, %s22
    %p233 = scmp.eq.s32.totalorder %s232, 0
    %s235 = sadd.s32 %s234, 1
    %s236 = scalar_select %p233, %s234, %s235
    %p239 = pneg %p233
    %p240 = scmp.eq.s32.totalorder %s15, 1
    %p241 = por %p239, %p240
    %p242 = scmp.ne.s32.totalorder %s234, %s237
    %p243 = scmp.eq.s32.totalorder %s15, 0
    %p244 = por %p242, %p243
    %p245 = scmp.ne.s32.totalorder %s234, %s237
    %p246 = scmp.eq.s32.totalorder %s20, 1
    %p247 = por %p245, %p246
    %p248 = scmp.ne.s32.totalorder %s237, %s238
    %p249 = scmp.eq.s32.totalorder %s20, 0
    %p250 = por %p248, %p249
    %p251 = scmp.ne.s32.totalorder %s237, %s238
    %p252 = scmp.eq.s32.totalorder %s21, 1
    %p253 = por %p251, %p252
    %p255 = scmp.ne.s32.totalorder %s238, %s254
    %p256 = scmp.eq.s32.totalorder %s21, 0
    %p257 = por %p255, %p256
    %p258 = scmp.le.s32.totalorder 1, %s15
    %p259 = scmp.lt.s32.totalorder %s15, 3
    %p260 = pnand %p258, %p259
    %p261 = pneg %p260
    // Predicated region
    $region9: #{deeplabv3_forward.1} parent=5 // pred_check
      _
    $region10: #{deeplabv3_forward.1} parent=5 // pred_check_branch
      %263 = sbr.rel (%p260) target = $region12
    $region11: #{deeplabv3_forward.1} parent=5 // pred_region
      %s264 = ssub.s32 %s15, 1
      // Predicated region
      $region13: #{deeplabv3_forward.1} parent=11 // pred_check
        %p265 = pneg %p140
      $region14: #{deeplabv3_forward.1} parent=11 // pred_check_branch
        %267 = sbr.rel (%p265) target = $region16
      $region15: #{deeplabv3_forward.1} parent=11 // pred_region
        _
      $region16: #{deeplabv3_forward.1} parent=11 // pred_fallthru
        _
      // Predicated region
      $region17: #{deeplabv3_forward.1} parent=11 // pred_check
        %p268 = pneg %p161
      $region18: #{deeplabv3_forward.1} parent=11 // pred_check_branch
        %270 = sbr.rel (%p268) target = $region20
      $region19: #{deeplabv3_forward.1} parent=11 // pred_region
        _
      $region20: #{deeplabv3_forward.1} parent=11 // pred_fallthru
        _
      // Predicated region
      $region21: #{deeplabv3_forward.1} parent=11 // pred_check
        %p271 = pneg %p182
      $region22: #{deeplabv3_forward.1} parent=11 // pred_check_branch
        %273 = sbr.rel (%p271) target = $region24
      $region23: #{deeplabv3_forward.1} parent=11 // pred_region
        _
      $region24: #{deeplabv3_forward.1} parent=11 // pred_fallthru
        _
      // Predicated region
      $region25: #{deeplabv3_forward.1} parent=11 // pred_check
        %p274 = pneg %p203
      $region26: #{deeplabv3_forward.1} parent=11 // pred_check_branch
        %276 = sbr.rel (%p274) target = $region28
      $region27: #{deeplabv3_forward.1} parent=11 // pred_region
        _
      $region28: #{deeplabv3_forward.1} parent=11 // pred_fallthru
        _
      // Predicated region
      $region29: #{deeplabv3_forward.1} parent=11 // pred_check
        %p277 = pneg %p224
      $region30: #{deeplabv3_forward.1} parent=11 // pred_check_branch
        %279 = sbr.rel (%p277) target = $region32
      $region31: #{deeplabv3_forward.1} parent=11 // pred_region
        _
      $region32: #{deeplabv3_forward.1} parent=11 // pred_fallthru
        _
    $region12: #{deeplabv3_forward.1} parent=5 // pred_fallthru
      _
    %p280 = scmp.lt.s32.totalorder %s15, 2
    // Predicated region
    $region33: #{deeplabv3_forward.1} parent=5 // pred_check
      %p281 = pneg %p280
    $region34: #{deeplabv3_forward.1} parent=5 // pred_check_branch
      %283 = sbr.rel (%p281) target = $region36
    $region35: #{deeplabv3_forward.1} parent=5 // pred_region
      // Predicated region
      $region37: #{deeplabv3_forward.1} parent=35 // pred_check
        %p284 = pneg %p35
      $region38: #{deeplabv3_forward.1} parent=35 // pred_check_branch
        %286 = sbr.rel (%p284) target = $region40
      $region39: #{deeplabv3_forward.1} parent=35 // pred_region
        %p287 = scmp.lt.s32.totalorder %s15, 1
        %s288 = scalar_select %p287, %s15, 1
        %s289 = smul.addr %s288, 18
        %s290 = smul.addr %s289, 8
        %s291 = scalar_lea.vmem %s0, %s290
      $region40: #{deeplabv3_forward.1} parent=35 // pred_fallthru
        _
      // Predicated region
      $region41: #{deeplabv3_forward.1} parent=35 // pred_check
        %p292 = pneg %p61
      $region42: #{deeplabv3_forward.1} parent=35 // pred_check_branch
        %294 = sbr.rel (%p292) target = $region44
      $region43: #{deeplabv3_forward.1} parent=35 // pred_region
        %p295 = scmp.lt.s32.totalorder %s15, 1
        %s296 = scalar_select %p295, %s15, 1
        %s297 = smul.addr %s296, 18
        %s298 = smul.addr %s297, 8
        %s299 = scalar_lea.vmem %s1, %s298
      $region44: #{deeplabv3_forward.1} parent=35 // pred_fallthru
        _
      // Predicated region
      $region45: #{deeplabv3_forward.1} parent=35 // pred_check
        %p300 = pneg %p87
      $region46: #{deeplabv3_forward.1} parent=35 // pred_check_branch
        %302 = sbr.rel (%p300) target = $region48
      $region47: #{deeplabv3_forward.1} parent=35 // pred_region
        %p303 = scmp.lt.s32.totalorder %s15, 1
        %s304 = scalar_select %p303, %s15, 1
        %s305 = smul.addr %s304, 18
        %s306 = smul.addr %s305, 8
        %s307 = scalar_lea.vmem %s2, %s306
      $region48: #{deeplabv3_forward.1} parent=35 // pred_fallthru
        _
      // Predicated region
      $region49: #{deeplabv3_forward.1} parent=35 // pred_check
        %p308 = pneg %p113
      $region50: #{deeplabv3_forward.1} parent=35 // pred_check_branch
        %310 = sbr.rel (%p308) target = $region52
      $region51: #{deeplabv3_forward.1} parent=35 // pred_region
        %p311 = scmp.lt.s32.totalorder %s15, 1
        %s312 = scalar_select %p311, %s15, 1
        %s313 = smul.addr %s312, 18
        %s314 = smul.addr %s313, 8
        %s315 = scalar_lea.vmem %s3, %s314
      $region52: #{deeplabv3_forward.1} parent=35 // pred_fallthru
        _
    $region36: #{deeplabv3_forward.1} parent=5 // pred_fallthru
      _
    %p316 = scmp.le.s32.totalorder 1, %s15
    %p317 = scmp.lt.s32.totalorder %s15, 3
    %p318 = pnand %p316, %p317
    %p319 = pneg %p318
    // Predicated region
    $region53: #{deeplabv3_forward.1} parent=5 // pred_check
      _
    $region54: #{deeplabv3_forward.1} parent=5 // pred_check_branch
      %321 = sbr.rel (%p318) target = $region56
    $region55: #{deeplabv3_forward.1} parent=5 // pred_region
      %s322 = ssub.s32 %s15, 1
      %p323 = scmp.lt.s32.totalorder %s20, 1
      %s324 = scalar_select %p323, %s20, 1
      %s325 = smul.addr %s324, 18
      %s326 = smul.addr %s325, 8
      %s327 = scalar_lea.vmem %s0, %s326
      %p328 = pneg %p41
      %p329 = pneg %p38
      %p330 = scmp.lt.s32.totalorder %s20, 1
      %s331 = scalar_select %p330, %s20, 1
      %s332 = smul.addr %s331, 18
      %s333 = smul.addr %s332, 8
      %s334 = scalar_lea.vmem %s1, %s333
      %p335 = pneg %p67
      %p336 = pneg %p64
      %p337 = scmp.lt.s32.totalorder %s20, 1
      %s338 = scalar_select %p337, %s20, 1
      %s339 = smul.addr %s338, 18
      %s340 = smul.addr %s339, 8
      %s341 = scalar_lea.vmem %s2, %s340
      %p342 = pneg %p93
      %p343 = pneg %p90
      %p344 = scmp.lt.s32.totalorder %s20, 1
      %s345 = scalar_select %p344, %s20, 1
      %s346 = smul.addr %s345, 18
      %s347 = smul.addr %s346, 8
      %s348 = scalar_lea.vmem %s3, %s347
      %p349 = pneg %p119
      %p350 = pneg %p116
      %p351 = pneg %p140
      %p352 = pneg %p137
      %p353 = pneg %p161
      %p354 = pneg %p158
      %p355 = pneg %p182
      %p356 = pneg %p179
      %p357 = pneg %p203
      %p358 = pneg %p200
      %p359 = pneg %p224
      %p360 = pneg %p221
      %p361 = pneg %p250
      %p362 = pneg %p247
      %s363 = smul.u32 32, %s20
      %p364 = scmp.lt.s32.totalorder %s363, 63
      %s365 = scalar_select %p364, %s363, 63
      %s366 = smul.addr %s365, 8
      %s367 = scalar_lea.vmem %s9, %s366
      %p368 = scmp.lt.s32.totalorder %s20, 1
      %s369 = scalar_select %p368, %s20, 1
      %s370 = smul.addr %s369, 18
      %s371 = smul.addr %s370, 8
      %s372 = scalar_lea.vmem %s0, %s371
      %p373 = scmp.lt.s32.totalorder %s20, 1
      %s374 = scalar_select %p373, %s20, 1
      %s375 = smul.addr %s374, 18
      %s376 = smul.addr %s375, 8
      %s377 = scalar_lea.vmem %s1, %s376
      %p378 = scmp.lt.s32.totalorder %s20, 1
      %s379 = scalar_select %p378, %s20, 1
      %s380 = smul.addr %s379, 18
      %s381 = smul.addr %s380, 8
      %s382 = scalar_lea.vmem %s2, %s381
      %p383 = scmp.lt.s32.totalorder %s20, 1
      %s384 = scalar_select %p383, %s20, 1
      %s385 = smul.addr %s384, 18
      %s386 = smul.addr %s385, 8
      %s387 = scalar_lea.vmem %s3, %s386
      %s388 = smul.u32 32, %s20
      %p389 = scmp.lt.s32.totalorder %s388, 63
      %s390 = scalar_select %p389, %s388, 63
      %s391 = smul.addr %s390, 8
      %s392 = scalar_lea.vmem %s9, %s391
      %s393 = smul.u32 32, %s20
      %v394 = vld [vmem:[%s372] sm:$0xff]
      %v395 = vld [vmem:[%s372 + $0x8] sm:$0x1]
      %v396 = vld [vmem:[%s372 + $0x10] sm:$0xff]
      %v397 = vld [vmem:[%s372 + $0x18] sm:$0x1]
      %v398 = vld [vmem:[%s372 + $0x20] sm:$0xff]
      %v399 = vld [vmem:[%s372 + $0x28] sm:$0x1]
      %v400 = vld [vmem:[%s372 + $0x30] sm:$0xff]
      %v401 = vld [vmem:[%s372 + $0x38] sm:$0x1]
      %v402 = vld [vmem:[%s372 + $0x40] sm:$0xff]
      %v403 = vld [vmem:[%s372 + $0x48] sm:$0x1]
      %v404 = vld [vmem:[%s372 + $0x50] sm:$0xff]
      %v405 = vld [vmem:[%s372 + $0x58] sm:$0x1]
      %v406 = vld [vmem:[%s372 + $0x60] sm:$0xff]
      %v407 = vld [vmem:[%s372 + $0x68] sm:$0x1]
      %v408 = vld [vmem:[%s372 + $0x70] sm:$0xff]
      %v409 = vld [vmem:[%s372 + $0x78] sm:$0x1]
      %v410 = vld [vmem:[%s372 + $0x80] sm:$0xff]
      %v411 = vld [vmem:[%s372 + $0x88] sm:$0x1]
      %v412 = vld [vmem:[%s377] sm:$0xff]
      %v413 = vld [vmem:[%s377 + $0x10] sm:$0xff]
      %v414 = vld [vmem:[%s377 + $0x20] sm:$0xff]
      %v415 = vld [vmem:[%s377 + $0x30] sm:$0xff]
      %v416 = vld [vmem:[%s377 + $0x40] sm:$0xff]
      %v417 = vld [vmem:[%s377 + $0x50] sm:$0xff]
      %v418 = vld [vmem:[%s377 + $0x60] sm:$0xff]
      %v419 = vld [vmem:[%s377 + $0x70] sm:$0xff]
      %v420 = vld [vmem:[%s377 + $0x80] sm:$0xff]
      %v421 = vld [vmem:[%s382] sm:$0xff]
      %v422 = vld [vmem:[%s382 + $0x8] sm:$0x1]
      %v423 = vld [vmem:[%s382 + $0x10] sm:$0xff]
      %v424 = vld [vmem:[%s382 + $0x18] sm:$0x1]
      %v425 = vld [vmem:[%s382 + $0x20] sm:$0xff]
      %v426 = vld [vmem:[%s382 + $0x28] sm:$0x1]
      %v427 = vld [vmem:[%s382 + $0x30] sm:$0xff]
      %v428 = vld [vmem:[%s382 + $0x38] sm:$0x1]
      %v429 = vld [vmem:[%s382 + $0x40] sm:$0xff]
      %v430 = vld [vmem:[%s382 + $0x48] sm:$0x1]
      %v431 = vld [vmem:[%s382 + $0x50] sm:$0xff]
      %v432 = vld [vmem:[%s382 + $0x58] sm:$0x1]
      %v433 = vld [vmem:[%s382 + $0x60] sm:$0xff]
      %v434 = vld [vmem:[%s382 + $0x68] sm:$0x1]
      %v435 = vld [vmem:[%s382 + $0x70] sm:$0xff]
      %v436 = vld [vmem:[%s382 + $0x78] sm:$0x1]
      %v437 = vld [vmem:[%s387] sm:$0xff]
      %v438 = vld [vmem:[%s387 + $0x10] sm:$0xff]
      %v439 = vld [vmem:[%s387 + $0x20] sm:$0xff]
      %v440 = vld [vmem:[%s387 + $0x30] sm:$0xff]
      %v441 = vld [vmem:[%s387 + $0x40] sm:$0xff]
      %v442 = vld [vmem:[%s387 + $0x50] sm:$0xff]
      %v443 = vld [vmem:[%s387 + $0x60] sm:$0xff]
      %v444 = vld [vmem:[%s387 + $0x70] sm:$0xff]
      %v445 = vld [vmem:[%s4] sm:$0xf]
      %s446 = scalar_lea.vmem %s4, 4
      %v447 = vld [vmem:[%s446] sm:$0xf]
      %vm448 = vcmask 31744
      %v450 = vsel %vm448, %v412, 0
      %v453 = vsel %vm448, %v413, 0
      %v456 = vsel %vm448, %v414, 0
      %v459 = vsel %vm448, %v415, 0
      %v462 = vsel %vm448, %v416, 0
      %v465 = vsel %vm448, %v417, 0
      %v468 = vsel %vm448, %v418, 0
      %v471 = vsel %vm448, %v419, 0
      %vm473 = vcmask 1043456
      %v475 = vsel %vm473, %v447, 0
      %477 = vmatprep.subr.mxu0 0.0
      %478 = vmatpush1.msra.mxu0 %v475
      %479 = vmatprep.subr.mxu0 0.0
      %480 = vmatpush1.msra.mxu0 0.0
      %481 = vmatprep.subr.mxu0 0.0
      %482 = vmatpush1.msra.mxu0 0.0
      %483 = vmatprep.subr.mxu0 0.0
      %484 = vmatpush1.msra.mxu0 0.0
      %485 = vmatprep.subr.mxu0 0.0
      %486 = vmatpush1.msra.mxu0 0.0
      %487 = vmatprep.subr.mxu0 0.0
      %488 = vmatpush1.msra.mxu0 0.0
      %489 = vmatprep.subr.mxu0 0.0
      %490 = vmatpush1.msra.mxu0 0.0
      %491 = vmatprep.subr.mxu0 0.0
      %492 = vmatpush1.msra.mxu0 0.0
      %493 = vmatprep.subr.mxu0 0.0
      %494 = vmatpush1.msra.mxu0 0.0
      %495 = vmatprep.subr.mxu0 0.0
      %496 = vmatpush1.msra.mxu0 0.0
      %497 = vmatprep.subr.mxu0 0.0
      %498 = vmatpush1.msra.mxu0 0.0
      %499 = vmatprep.subr.mxu0 0.0
      %500 = vmatpush1.msra.mxu0 0.0
      %501 = vmatprep.subr.mxu0 0.0
      %502 = vmatpush1.msra.mxu0 0.0
      %503 = vmatprep.subr.mxu0 0.0
      %504 = vmatpush1.msra.mxu0 0.0
      %505 = vmatprep.subr.mxu0 0.0
      %506 = vmatpush1.msra.mxu0 0.0
      %507 = vmatprep.subr.mxu0 0.0
      %508 = vmatpush1.msra.mxu0 0.0
      %509 = vmatprep.subr.mxu0 0.0
      %510 = vmatpush1.msra.mxu0 0.0
      %511 = vmatprep.subr.mxu0 0.0
      %512 = vmatpush1.msra.mxu0 0.0
      %513 = vmatprep.subr.mxu0 0.0
      %514 = vmatpush1.msra.mxu0 0.0
      %515 = vmatprep.subr.mxu0 0.0
      %516 = vmatpush1.msra.mxu0 0.0
      %517 = vmatprep.subr.mxu0 0.0
      %518 = vmatpush1.msra.mxu0 0.0
      %519 = vmatprep.subr.mxu0 0.0
      %520 = vmatpush1.msra.mxu0 0.0
      %521 = vmatprep.subr.mxu0 0.0
      %522 = vmatpush1.msra.mxu0 0.0
      %523 = vmatprep.subr.mxu0 0.0
      %524 = vmatpush1.msra.mxu0 0.0
      %525 = vmatprep.subr.mxu0 0.0
      %526 = vmatpush1.msra.mxu0 0.0
      %527 = vmatprep.subr.mxu0 0.0
      %528 = vmatpush1.msra.mxu0 0.0
      %529 = vmatprep.subr.mxu0 0.0
      %530 = vmatpush1.msra.mxu0 0.0
      %531 = vmatprep.subr.mxu0 0.0
      %532 = vmatpush1.msra.mxu0 0.0
      %533 = vmatprep.subr.mxu0 0.0
      %534 = vmatpush1.msra.mxu0 0.0
      %535 = vmatprep.subr.mxu0 0.0
      %536 = vmatpush1.msra.mxu0 0.0
      %537 = vmatprep.subr.mxu0 0.0
      %538 = vmatpush1.msra.mxu0 0.0
      %539 = vmatprep.subr.mxu0 0.0
      %540 = vmatpush1.msra.mxu0 0.0
      %541 = vmatprep.mubr.f32.mxu0 0.0
      %542 = vmatmul.mubr.f32.gmra.mrb[0].mxu0 %v450
      %v543 = vpop.f32.mrb[0].mxu0
      %v544 = vadd.f32 0.0, %v543
      %v545 = vpop.f32.mrb[0].mxu0
      %546 = vmatprep.mubr.f32.mxu0 0.0
      %547 = vmatmul.mubr.f32.gmra.mrb[0].mxu0 %v453
      %v548 = vpop.f32.mrb[0].mxu0
      %v549 = vadd.f32 0.0, %v548
      %v550 = vpop.f32.mrb[0].mxu0
      %551 = vmatprep.mubr.f32.mxu0 0.0
      %552 = vmatmul.mubr.f32.gmra.mrb[0].mxu0 %v456
      %v553 = vpop.f32.mrb[0].mxu0
      %v554 = vadd.f32 0.0, %v553
      %v555 = vpop.f32.mrb[0].mxu0
      %556 = vmatprep.mubr.f32.mxu0 0.0
      %557 = vmatmul.mubr.f32.gmra.mrb[0].mxu0 %v459
      %v558 = vpop.f32.mrb[0].mxu0
      %v559 = vadd.f32 0.0, %v558
      %v560 = vpop.f32.mrb[0].mxu0
      %561 = vmatprep.mubr.f32.mxu0 0.0
      %562 = vmatmul.mubr.f32.gmra.mrb[0].mxu0 %v462
      %v563 = vpop.f32.mrb[0].mxu0
      %v564 = vadd.f32 0.0, %v563
      %v565 = vpop.f32.mrb[0].mxu0
      %566 = vmatprep.mubr.f32.mxu0 0.0
      %567 = vmatmul.mubr.f32.gmra.mrb[0].mxu0 %v465
      %v568 = vpop.f32.mrb[0].mxu0
      %v569 = vadd.f32 0.0, %v568
      %v570 = vpop.f32.mrb[0].mxu0
      %571 = vmatprep.mubr.f32.mxu0 0.0
      %572 = vmatmul.mubr.f32.gmra.mrb[0].mxu0 %v468
      %v573 = vpop.f32.mrb[0].mxu0
      %v574 = vadd.f32 0.0, %v573
      %v575 = vpop.f32.mrb[0].mxu0
      %576 = vmatprep.mubr.f32.mxu0 0.0
      %577 = vmatmul.mubr.f32.gmra.mrb[0].mxu0 %v471
      %v578 = vpop.f32.mrb[0].mxu0
      %v579 = vadd.f32 0.0, %v578
      %v580 = vpop.f32.mrb[0].mxu0
      %581 = vdwg.mxu0
      %v583 = vsel %vm448, %v394, 0
      %v586 = vsel %vm448, %v396, 0
      %v589 = vsel %vm448, %v398, 0
      %v592 = vsel %vm448, %v400, 0
      %v595 = vsel %vm448, %v402, 0
      %v598 = vsel %vm448, %v404, 0
      %v601 = vsel %vm448, %v406, 0
      %v604 = vsel %vm448, %v408, 0
      %v607 = vsel %vm473, %v445, 0
      %609 = vmatprep.subr.mxu0 0.0
      %610 = vmatpush1.msra.mxu0 %v607
      %611 = vmatprep.subr.mxu0 0.0
      %612 = vmatpush1.msra.mxu0 0.0
      %613 = vmatprep.subr.mxu0 0.0
      %614 = vmatpush1.msra.mxu0 0.0
      %615 = vmatprep.subr.mxu0 0.0
      %616 = vmatpush1.msra.mxu0 0.0
      %617 = vmatprep.subr.mxu0 0.0
      %618 = vmatpush1.msra.mxu0 0.0
      %619 = vmatprep.subr.mxu0 0.0
      %620 = vmatpush1.msra.mxu0 0.0
      %621 = vmatprep.subr.mxu0 0.0
      %622 = vmatpush1.msra.mxu0 0.0
      %623 = vmatprep.subr.mxu0 0.0
      %624 = vmatpush1.msra.mxu0 0.0
      %625 = vmatprep.subr.mxu0 0.0
      %626 = vmatpush1.msra.mxu0 0.0
      %627 = vmatprep.subr.mxu0 0.0
      %628 = vmatpush1.msra.mxu0 0.0
      %629 = vmatprep.subr.mxu0 0.0
      %630 = vmatpush1.msra.mxu0 0.0
      %631 = vmatprep.subr.mxu0 0.0
      %632 = vmatpush1.msra.mxu0 0.0
      %633 = vmatprep.subr.mxu0 0.0
      %634 = vmatpush1.msra.mxu0 0.0
      %635 = vmatprep.subr.mxu0 0.0
      %636 = vmatpush1.msra.mxu0 0.0
      %637 = vmatprep.subr.mxu0 0.0
      %638 = vmatpush1.msra.mxu0 0.0
      %639 = vmatprep.subr.mxu0 0.0
      %640 = vmatpush1.msra.mxu0 0.0
      %641 = vmatprep.subr.mxu0 0.0
      %642 = vmatpush1.msra.mxu0 0.0
      %643 = vmatprep.subr.mxu0 0.0
      %644 = vmatpush1.msra.mxu0 0.0
      %645 = vmatprep.subr.mxu0 0.0
      %646 = vmatpush1.msra.mxu0 0.0
      %647 = vmatprep.subr.mxu0 0.0
      %648 = vmatpush1.msra.mxu0 0.0
      %649 = vmatprep.subr.mxu0 0.0
      %650 = vmatpush1.msra.mxu0 0.0
      %651 = vmatprep.subr.mxu0 0.0
      %652 = vmatpush1.msra.mxu0 0.0
      %653 = vmatprep.subr.mxu0 0.0
      %654 = vmatpush1.msra.mxu0 0.0
      %655 = vmatprep.subr.mxu0 0.0
      %656 = vmatpush1.msra.mxu0 0.0
      %657 = vmatprep.subr.mxu0 0.0
      %658 = vmatpush1.msra.mxu0 0.0
      %659 = vmatprep.subr.mxu0 0.0
      %660 = vmatpush1.msra.mxu0 0.0
      %661 = vmatprep.subr.mxu0 0.0
      %662 = vmatpush1.msra.mxu0 0.0
      %663 = vmatprep.subr.mxu0 0.0
      %664 = vmatpush1.msra.mxu0 0.0
      %665 = vmatprep.subr.mxu0 0.0
      %666 = vmatpush1.msra.mxu0 0.0
      %667 = vmatprep.subr.mxu0 0.0
      %668 = vmatpush1.msra.mxu0 0.0
      %669 = vmatprep.subr.mxu0 0.0
      %670 = vmatpush1.msra.mxu0 0.0
      %671 = vmatprep.subr.mxu0 0.0
      %672 = vmatpush1.msra.mxu0 0.0
      %673 = vmatprep.mubr.f32.mxu0 0.0
      %674 = vmatmul.mubr.f32.gmra.mrb[0].mxu0 %v583
      %v675 = vpop.f32.mrb[0].mxu0
      %v676 = vadd.f32 %v544, %v675
      %v677 = vpop.f32.mrb[0].mxu0
      %678 = vmatprep.mubr.f32.mxu0 0.0
      %679 = vmatmul.mubr.f32.gmra.mrb[0].mxu0 %v586
      %v680 = vpop.f32.mrb[0].mxu0
      %v681 = vadd.f32 %v549, %v680
      %v682 = vpop.f32.mrb[0].mxu0
      %683 = vmatprep.mubr.f32.mxu0 0.0
      %684 = vmatmul.mubr.f32.gmra.mrb[0].mxu0 %v589
      %v685 = vpop.f32.mrb[0].mxu0
      %v686 = vadd.f32 %v554, %v685
      %v687 = vpop.f32.mrb[0].mxu0
      %688 = vmatprep.mubr.f32.mxu0 0.0
      %689 = vmatmul.mubr.f32.gmra.mrb[0].mxu0 %v592
      %v690 = vpop.f32.mrb[0].mxu0
      %v691 = vadd.f32 %v559, %v690
      %v692 = vpop.f32.mrb[0].mxu0
      %693 = vmatprep.mubr.f32.mxu0 0.0
      %694 = vmatmul.mubr.f32.gmra.mrb[0].mxu0 %v595
      %v695 = vpop.f32.mrb[0].mxu0
      %v696 = vadd.f32 %v564, %v695
      %v697 = vpop.f32.mrb[0].mxu0
      %698 = vmatprep.mubr.f32.mxu0 0.0
      %699 = vmatmul.mubr.f32.gmra.mrb[0].mxu0 %v598
      %v700 = vpop.f32.mrb[0].mxu0
      %v701 = vadd.f32 %v569, %v700
      %v702 = vpop.f32.mrb[0].mxu0
      %703 = vmatprep.mubr.f32.mxu0 0.0
      %704 = vmatmul.mubr.f32.gmra.mrb[0].mxu0 %v601
      %v705 = vpop.f32.mrb[0].mxu0
      %v706 = vadd.f32 %v574, %v705
      %v707 = vpop.f32.mrb[0].mxu0
      %708 = vmatprep.mubr.f32.mxu0 0.0
      %709 = vmatmul.mubr.f32.gmra.mrb[0].mxu0 %v604
      %v710 = vpop.f32.mrb[0].mxu0
      %v711 = vadd.f32 %v579, %v710
      %v712 = vpop.f32.mrb[0].mxu0
      %713 = vdwg.mxu0
      %vm722 = vcmask 1046528
      %v723 = vrot.slane %v394, 1
      %v724 = vrot.slane %v395, 1
      %v725 = vsel %vm722, %v723, %v724
      %v726 = vrot.slane %v396, 1
      %v727 = vrot.slane %v397, 1
      %v728 = vsel %vm722, %v726, %v727
      %v729 = vrot.slane %v398, 1
      %v730 = vrot.slane %v399, 1
      %v731 = vsel %vm722, %v729, %v730
      %v732 = vrot.slane %v400, 1
      %v733 = vrot.slane %v401, 1
      %v734 = vsel %vm722, %v732, %v733
      %v735 = vrot.slane %v402, 1
      %v736 = vrot.slane %v403, 1
      %v737 = vsel %vm722, %v735, %v736
      %v738 = vrot.slane %v404, 1
      %v739 = vrot.slane %v405, 1
      %v740 = vsel %vm722, %v738, %v739
      %v741 = vrot.slane %v406, 1
      %v742 = vrot.slane %v407, 1
      %v743 = vsel %vm722, %v741, %v742
      %v744 = vrot.slane %v408, 1
      %v745 = vrot.slane %v409, 1
      %v746 = vsel %vm722, %v744, %v745
      %s747 = scalar_lea.vmem %s4, 8
      %v748 = vld [vmem:[%s747] sm:$0xf]
      %v749 = vsel %vm448, %v725, 0
      %v751 = vsel %vm448, %v728, 0
      %v753 = vsel %vm448, %v731, 0
      %v755 = vsel %vm448, %v734, 0
      %v757 = vsel %vm448, %v737, 0
      %v759 = vsel %vm448, %v740, 0
      %v761 = vsel %vm448, %v743, 0
      %v763 = vsel %vm448, %v746, 0
      %v766 = vsel %vm473, %v748, 0
      %768 = vmatprep.subr.mxu0 0.0
      %769 = vmatpush1.msra.mxu0 %v766
      %770 = vmatprep.subr.mxu0 0.0
      %771 = vmatpush1.msra.mxu0 0.0
      %772 = vmatprep.subr.mxu0 0.0
      %773 = vmatpush1.msra.mxu0 0.0
      %774 = vmatprep.subr.mxu0 0.0
      %775 = vmatpush1.msra.mxu0 0.0
      %776 = vmatprep.subr.mxu0 0.0
      %777 = vmatpush1.msra.mxu0 0.0
      %778 = vmatprep.subr.mxu0 0.0
      %779 = vmatpush1.msra.mxu0 0.0
      %780 = vmatprep.subr.mxu0 0.0
      %781 = vmatpush1.msra.mxu0 0.0
      %782 = vmatprep.subr.mxu0 0.0
      %783 = vmatpush1.msra.mxu0 0.0
      %784 = vmatprep.subr.mxu0 0.0
      %785 = vmatpush1.msra.mxu0 0.0
      %786 = vmatprep.subr.mxu0 0.0
      %787 = vmatpush1.msra.mxu0 0.0
      %788 = vmatprep.subr.mxu0 0.0
      %789 = vmatpush1.msra.mxu0 0.0
      %790 = vmatprep.subr.mxu0 0.0
      %791 = vmatpush1.msra.mxu0 0.0
      %792 = vmatprep.subr.mxu0 0.0
      %793 = vmatpush1.msra.mxu0 0.0
      %794 = vmatprep.subr.mxu0 0.0
      %795 = vmatpush1.msra.mxu0 0.0
      %796 = vmatprep.subr.mxu0 0.0
      %797 = vmatpush1.msra.mxu0 0.0
      %798 = vmatprep.subr.mxu0 0.0
      %799 = vmatpush1.msra.mxu0 0.0
      %800 = vmatprep.subr.mxu0 0.0
      %801 = vmatpush1.msra.mxu0 0.0
      %802 = vmatprep.subr.mxu0 0.0
      %803 = vmatpush1.msra.mxu0 0.0
      %804 = vmatprep.subr.mxu0 0.0
      %805 = vmatpush1.msra.mxu0 0.0
      %806 = vmatprep.subr.mxu0 0.0
      %807 = vmatpush1.msra.mxu0 0.0
      %808 = vmatprep.subr.mxu0 0.0
      %809 = vmatpush1.msra.mxu0 0.0
      %810 = vmatprep.subr.mxu0 0.0
      %811 = vmatpush1.msra.mxu0 0.0
      %812 = vmatprep.subr.mxu0 0.0
      %813 = vmatpush1.msra.mxu0 0.0
      %814 = vmatprep.subr.mxu0 0.0
      %815 = vmatpush1.msra.mxu0 0.0
      %816 = vmatprep.subr.mxu0 0.0
      %817 = vmatpush1.msra.mxu0 0.0
      %818 = vmatprep.subr.mxu0 0.0
      %819 = vmatpush1.msra.mxu0 0.0
      %820 = vmatprep.subr.mxu0 0.0
      %821 = vmatpush1.msra.mxu0 0.0
      %822 = vmatprep.subr.mxu0 0.0
      %823 = vmatpush1.msra.mxu0 0.0
      %824 = vmatprep.subr.mxu0 0.0
      %825 = vmatpush1.msra.mxu0 0.0
      %826 = vmatprep.subr.mxu0 0.0
      %827 = vmatpush1.msra.mxu0 0.0
      %828 = vmatprep.subr.mxu0 0.0
      %829 = vmatpush1.msra.mxu0 0.0
      %830 = vmatprep.subr.mxu0 0.0
      %831 = vmatpush1.msra.mxu0 0.0
      %832 = vmatprep.mubr.f32.mxu0 0.0
      %833 = vmatmul.mubr.f32.gmra.mrb[0].mxu0 %v749
      %v834 = vpop.f32.mrb[0].mxu0
      %v835 = vadd.f32 0.0, %v834
      %v836 = vpop.f32.mrb[0].mxu0
      %837 = vmatprep.mubr.f32.mxu0 0.0
      %838 = vmatmul.mubr.f32.gmra.mrb[0].mxu0 %v751
      %v839 = vpop.f32.mrb[0].mxu0
      %v840 = vadd.f32 0.0, %v839
      %v841 = vpop.f32.mrb[0].mxu0
      %842 = vmatprep.mubr.f32.mxu0 0.0
      %843 = vmatmul.mubr.f32.gmra.mrb[0].mxu0 %v753
      %v844 = vpop.f32.mrb[0].mxu0
      %v845 = vadd.f32 0.0, %v844
      %v846 = vpop.f32.mrb[0].mxu0
      %847 = vmatprep.mubr.f32.mxu0 0.0
      %848 = vmatmul.mubr.f32.gmra.mrb[0].mxu0 %v755
      %v849 = vpop.f32.mrb[0].mxu0
      %v850 = vadd.f32 0.0, %v849
      %v851 = vpop.f32.mrb[0].mxu0
      %852 = vmatprep.mubr.f32.mxu0 0.0
      %853 = vmatmul.mubr.f32.gmra.mrb[0].mxu0 %v757
      %v854 = vpop.f32.mrb[0].mxu0
      %v855 = vadd.f32 0.0, %v854
      %v856 = vpop.f32.mrb[0].mxu0
      %857 = vmatprep.mubr.f32.mxu0 0.0
      %858 = vmatmul.mubr.f32.gmra.mrb[0].mxu0 %v759
      %v859 = vpop.f32.mrb[0].mxu0
      %v860 = vadd.f32 0.0, %v859
      %v861 = vpop.f32.mrb[0].mxu0
      %862 = vmatprep.mubr.f32.mxu0 0.0
      %863 = vmatmul.mubr.f32.gmra.mrb[0].mxu0 %v761
      %v864 = vpop.f32.mrb[0].mxu0
      %v865 = vadd.f32 0.0, %v864
      %v866 = vpop.f32.mrb[0].mxu0
      %867 = vmatprep.mubr.f32.mxu0 0.0
      %868 = vmatmul.mubr.f32.gmra.mrb[0].mxu0 %v763
      %v869 = vpop.f32.mrb[0].mxu0
      %v870 = vadd.f32 0.0, %v869
      %v871 = vpop.f32.mrb[0].mxu0
      %872 = vdwg.mxu0
      %v873 = vadd.f32 %v676, %v835
      %v874 = vadd.f32 %v681, %v840
      %v875 = vadd.f32 %v686, %v845
      %v876 = vadd.f32 %v691, %v850
      %v877 = vadd.f32 %v696, %v855
      %v878 = vadd.f32 %v701, %v860
      %v879 = vadd.f32 %v706, %v865
      %v880 = vadd.f32 %v711, %v870
      %s881 = scalar_lea.vmem %s4, 12
      %v882 = vld [vmem:[%s881] sm:$0xf]
      %v884 = vsel %vm448, %v421, 0
      %v887 = vsel %vm448, %v423, 0
      %v890 = vsel %vm448, %v425, 0
      %v893 = vsel %vm448, %v427, 0
      %v896 = vsel %vm448, %v429, 0
      %v899 = vsel %vm448, %v431, 0
      %v902 = vsel %vm448, %v433, 0
      %v905 = vsel %vm448, %v435, 0
      %v908 = vsel %vm473, %v882, 0
      %910 = vmatprep.subr.mxu0 0.0
      %911 = vmatpush1.msra.mxu0 %v908
      %912 = vmatprep.subr.mxu0 0.0
      %913 = vmatpush1.msra.mxu0 0.0
      %914 = vmatprep.subr.mxu0 0.0
      %915 = vmatpush1.msra.mxu0 0.0
      %916 = vmatprep.subr.mxu0 0.0
      %917 = vmatpush1.msra.mxu0 0.0
      %918 = vmatprep.subr.mxu0 0.0
      %919 = vmatpush1.msra.mxu0 0.0
      %920 = vmatprep.subr.mxu0 0.0
      %921 = vmatpush1.msra.mxu0 0.0
      %922 = vmatprep.subr.mxu0 0.0
      %923 = vmatpush1.msra.mxu0 0.0
      %924 = vmatprep.subr.mxu0 0.0
      %925 = vmatpush1.msra.mxu0 0.0
      %926 = vmatprep.subr.mxu0 0.0
      %927 = vmatpush1.msra.mxu0 0.0
      %928 = vmatprep.subr.mxu0 0.0
      %929 = vmatpush1.msra.mxu0 0.0
      %930 = vmatprep.subr.mxu0 0.0
      %931 = vmatpush1.msra.mxu0 0.0
      %932 = vmatprep.subr.mxu0 0.0
      %933 = vmatpush1.msra.mxu0 0.0
      %934 = vmatprep.subr.mxu0 0.0
      %935 = vmatpush1.msra.mxu0 0.0
      %936 = vmatprep.subr.mxu0 0.0
      %937 = vmatpush1.msra.mxu0 0.0
      %938 = vmatprep.subr.mxu0 0.0
      %939 = vmatpush1.msra.mxu0 0.0
      %940 = vmatprep.subr.mxu0 0.0
      %941 = vmatpush1.msra.mxu0 0.0
      %942 = vmatprep.subr.mxu0 0.0
      %943 = vmatpush1.msra.mxu0 0.0
      %944 = vmatprep.subr.mxu0 0.0
      %945 = vmatpush1.msra.mxu0 0.0
      %946 = vmatprep.subr.mxu0 0.0
      %947 = vmatpush1.msra.mxu0 0.0
      %948 = vmatprep.subr.mxu0 0.0
      %949 = vmatpush1.msra.mxu0 0.0
      %950 = vmatprep.subr.mxu0 0.0
      %951 = vmatpush1.msra.mxu0 0.0
      %952 = vmatprep.subr.mxu0 0.0
      %953 = vmatpush1.msra.mxu0 0.0
      %954 = vmatprep.subr.mxu0 0.0
      %955 = vmatpush1.msra.mxu0 0.0
      %956 = vmatprep.subr.mxu0 0.0
      %957 = vmatpush1.msra.mxu0 0.0
      %958 = vmatprep.subr.mxu0 0.0
      %959 = vmatpush1.msra.mxu0 0.0
      %960 = vmatprep.subr.mxu0 0.0
      %961 = vmatpush1.msra.mxu0 0.0
      %962 = vmatprep.subr.mxu0 0.0
      %963 = vmatpush1.msra.mxu0 0.0
      %964 = vmatprep.subr.mxu0 0.0
      %965 = vmatpush1.msra.mxu0 0.0
      %966 = vmatprep.subr.mxu0 0.0
      %967 = vmatpush1.msra.mxu0 0.0
      %968 = vmatprep.subr.mxu0 0.0
      %969 = vmatpush1.msra.mxu0 0.0
      %970 = vmatprep.subr.mxu0 0.0
      %971 = vmatpush1.msra.mxu0 0.0
      %972 = vmatprep.subr.mxu0 0.0
      %973 = vmatpush1.msra.mxu0 0.0
      %974 = vmatprep.mubr.f32.mxu0 0.0
      %975 = vmatmul.mubr.f32.gmra.mrb[0].mxu0 %v884
      %v976 = vpop.f32.mrb[0].mxu0
      %v977 = vadd.f32 0.0, %v976
      %v978 = vpop.f32.mrb[0].mxu0
      %979 = vmatprep.mubr.f32.mxu0 0.0
      %980 = vmatmul.mubr.f32.gmra.mrb[0].mxu0 %v887
      %v981 = vpop.f32.mrb[0].mxu0
      %v982 = vadd.f32 0.0, %v981
      %v983 = vpop.f32.mrb[0].mxu0
      %984 = vmatprep.mubr.f32.mxu0 0.0
      %985 = vmatmul.mubr.f32.gmra.mrb[0].mxu0 %v890
      %v986 = vpop.f32.mrb[0].mxu0
      %v987 = vadd.f32 0.0, %v986
      %v988 = vpop.f32.mrb[0].mxu0
      %989 = vmatprep.mubr.f32.mxu0 0.0
      %990 = vmatmul.mubr.f32.gmra.mrb[0].mxu0 %v893
      %v991 = vpop.f32.mrb[0].mxu0
      %v992 = vadd.f32 0.0, %v991
      %v993 = vpop.f32.mrb[0].mxu0
      %994 = vmatprep.mubr.f32.mxu0 0.0
      %995 = vmatmul.mubr.f32.gmra.mrb[0].mxu0 %v896
      %v996 = vpop.f32.mrb[0].mxu0
      %v997 = vadd.f32 0.0, %v996
      %v998 = vpop.f32.mrb[0].mxu0
      %999 = vmatprep.mubr.f32.mxu0 0.0
      %1000 = vmatmul.mubr.f32.gmra.mrb[0].mxu0 %v899
      %v1001 = vpop.f32.mrb[0].mxu0
      %v1002 = vadd.f32 0.0, %v1001
      %v1003 = vpop.f32.mrb[0].mxu0
      %1004 = vmatprep.mubr.f32.mxu0 0.0
      %1005 = vmatmul.mubr.f32.gmra.mrb[0].mxu0 %v902
      %v1006 = vpop.f32.mrb[0].mxu0
      %v1007 = vadd.f32 0.0, %v1006
      %v1008 = vpop.f32.mrb[0].mxu0
      %1009 = vmatprep.mubr.f32.mxu0 0.0
      %1010 = vmatmul.mubr.f32.gmra.mrb[0].mxu0 %v905
      %v1011 = vpop.f32.mrb[0].mxu0
      %v1012 = vadd.f32 0.0, %v1011
      %v1013 = vpop.f32.mrb[0].mxu0
      %1014 = vdwg.mxu0
      %v1015 = vadd.f32 %v873, %v977
      %v1016 = vadd.f32 %v874, %v982
      %v1017 = vadd.f32 %v875, %v987
      %v1018 = vadd.f32 %v876, %v992
      %v1019 = vadd.f32 %v877, %v997
      %v1020 = vadd.f32 %v878, %v1002
      %v1021 = vadd.f32 %v879, %v1007
      %v1022 = vadd.f32 %v880, %v1012
      %s1023 = scalar_lea.vmem %s4, 16
      %v1024 = vld [vmem:[%s1023] sm:$0xf]
      %v1026 = vsel %vm448, %v437, 0
      %v1029 = vsel %vm448, %v438, 0
      %v1032 = vsel %vm448, %v439, 0
      %v1035 = vsel %vm448, %v440, 0
      %v1038 = vsel %vm448, %v441, 0
      %v1041 = vsel %vm448, %v442, 0
      %v1044 = vsel %vm448, %v443, 0
      %v1047 = vsel %vm448, %v444, 0
      %v1050 = vsel %vm473, %v1024, 0
      %1052 = vmatprep.subr.mxu0 0.0
      %1053 = vmatpush1.msra.mxu0 %v1050
      %1054 = vmatprep.subr.mxu0 0.0
      %1055 = vmatpush1.msra.mxu0 0.0
      %1056 = vmatprep.subr.mxu0 0.0
      %1057 = vmatpush1.msra.mxu0 0.0
      %1058 = vmatprep.subr.mxu0 0.0
      %1059 = vmatpush1.msra.mxu0 0.0
      %1060 = vmatprep.subr.mxu0 0.0
      %1061 = vmatpush1.msra.mxu0 0.0
      %1062 = vmatprep.subr.mxu0 0.0
      %1063 = vmatpush1.msra.mxu0 0.0
      %1064 = vmatprep.subr.mxu0 0.0
      %1065 = vmatpush1.msra.mxu0 0.0
      %1066 = vmatprep.subr.mxu0 0.0
      %1067 = vmatpush1.msra.mxu0 0.0
      %1068 = vmatprep.subr.mxu0 0.0
      %1069 = vmatpush1.msra.mxu0 0.0
      %1070 = vmatprep.subr.mxu0 0.0
      %1071 = vmatpush1.msra.mxu0 0.0
      %1072 = vmatprep.subr.mxu0 0.0
      %1073 = vmatpush1.msra.mxu0 0.0
      %1074 = vmatprep.subr.mxu0 0.0
      %1075 = vmatpush1.msra.mxu0 0.0
      %1076 = vmatprep.subr.mxu0 0.0
      %1077 = vmatpush1.msra.mxu0 0.0
      %1078 = vmatprep.subr.mxu0 0.0
      %1079 = vmatpush1.msra.mxu0 0.0
      %1080 = vmatprep.subr.mxu0 0.0
      %1081 = vmatpush1.msra.mxu0 0.0
      %1082 = vmatprep.subr.mxu0 0.0
      %1083 = vmatpush1.msra.mxu0 0.0
      %1084 = vmatprep.subr.mxu0 0.0
      %1085 = vmatpush1.msra.mxu0 0.0
      %1086 = vmatprep.subr.mxu0 0.0
      %1087 = vmatpush1.msra.mxu0 0.0
      %1088 = vmatprep.subr.mxu0 0.0
      %1089 = vmatpush1.msra.mxu0 0.0
      %1090 = vmatprep.subr.mxu0 0.0
      %1091 = vmatpush1.msra.mxu0 0.0
      %1092 = vmatprep.subr.mxu0 0.0
      %1093 = vmatpush1.msra.mxu0 0.0
      %1094 = vmatprep.subr.mxu0 0.0
      %1095 = vmatpush1.msra.mxu0 0.0
      %1096 = vmatprep.subr.mxu0 0.0
      %1097 = vmatpush1.msra.mxu0 0.0
      %1098 = vmatprep.subr.mxu0 0.0
      %1099 = vmatpush1.msra.mxu0 0.0
      %1100 = vmatprep.subr.mxu0 0.0
      %1101 = vmatpush1.msra.mxu0 0.0
      %1102 = vmatprep.subr.mxu0 0.0
      %1103 = vmatpush1.msra.mxu0 0.0
      %1104 = vmatprep.subr.mxu0 0.0
      %1105 = vmatpush1.msra.mxu0 0.0
      %1106 = vmatprep.subr.mxu0 0.0
      %1107 = vmatpush1.msra.mxu0 0.0
      %1108 = vmatprep.subr.mxu0 0.0
      %1109 = vmatpush1.msra.mxu0 0.0
      %1110 = vmatprep.subr.mxu0 0.0
      %1111 = vmatpush1.msra.mxu0 0.0
      %1112 = vmatprep.subr.mxu0 0.0
      %1113 = vmatpush1.msra.mxu0 0.0
      %1114 = vmatprep.subr.mxu0 0.0
      %1115 = vmatpush1.msra.mxu0 0.0
      %1116 = vmatprep.mubr.f32.mxu0 0.0
      %1117 = vmatmul.mubr.f32.gmra.mrb[0].mxu0 %v1026
      %v1118 = vpop.f32.mrb[0].mxu0
      %v1119 = vadd.f32 0.0, %v1118
      %v1120 = vpop.f32.mrb[0].mxu0
      %1121 = vmatprep.mubr.f32.mxu0 0.0
      %1122 = vmatmul.mubr.f32.gmra.mrb[0].mxu0 %v1029
      %v1123 = vpop.f32.mrb[0].mxu0
      %v1124 = vadd.f32 0.0, %v1123
      %v1125 = vpop.f32.mrb[0].mxu0
      %1126 = vmatprep.mubr.f32.mxu0 0.0
      %1127 = vmatmul.mubr.f32.gmra.mrb[0].mxu0 %v1032
      %v1128 = vpop.f32.mrb[0].mxu0
      %v1129 = vadd.f32 0.0, %v1128
      %v1130 = vpop.f32.mrb[0].mxu0
      %1131 = vmatprep.mubr.f32.mxu0 0.0
      %1132 = vmatmul.mubr.f32.gmra.mrb[0].mxu0 %v1035
      %v1133 = vpop.f32.mrb[0].mxu0
      %v1134 = vadd.f32 0.0, %v1133
      %v1135 = vpop.f32.mrb[0].mxu0
      %1136 = vmatprep.mubr.f32.mxu0 0.0
      %1137 = vmatmul.mubr.f32.gmra.mrb[0].mxu0 %v1038
      %v1138 = vpop.f32.mrb[0].mxu0
      %v1139 = vadd.f32 0.0, %v1138
      %v1140 = vpop.f32.mrb[0].mxu0
      %1141 = vmatprep.mubr.f32.mxu0 0.0
      %1142 = vmatmul.mubr.f32.gmra.mrb[0].mxu0 %v1041
      %v1143 = vpop.f32.mrb[0].mxu0
      %v1144 = vadd.f32 0.0, %v1143
      %v1145 = vpop.f32.mrb[0].mxu0
      %1146 = vmatprep.mubr.f32.mxu0 0.0
      %1147 = vmatmul.mubr.f32.gmra.mrb[0].mxu0 %v1044
      %v1148 = vpop.f32.mrb[0].mxu0
      %v1149 = vadd.f32 0.0, %v1148
      %v1150 = vpop.f32.mrb[0].mxu0
      %1151 = vmatprep.mubr.f32.mxu0 0.0
      %1152 = vmatmul.mubr.f32.gmra.mrb[0].mxu0 %v1047
      %v1153 = vpop.f32.mrb[0].mxu0
      %v1154 = vadd.f32 0.0, %v1153
      %v1155 = vpop.f32.mrb[0].mxu0
      %1156 = vdwg.mxu0
      %v1157 = vadd.f32 %v1015, %v1119
      %v1158 = vadd.f32 %v1016, %v1124
      %v1159 = vadd.f32 %v1017, %v1129
      %v1160 = vadd.f32 %v1018, %v1134
      %v1161 = vadd.f32 %v1019, %v1139
      %v1162 = vadd.f32 %v1020, %v1144
      %v1163 = vadd.f32 %v1021, %v1149
      %v1164 = vadd.f32 %v1022, %v1154
      %v1173 = vrot.slane %v421, 1
      %v1174 = vrot.slane %v422, 1
      %v1175 = vsel %vm722, %v1173, %v1174
      %v1176 = vrot.slane %v423, 1
      %v1177 = vrot.slane %v424, 1
      %v1178 = vsel %vm722, %v1176, %v1177
      %v1179 = vrot.slane %v425, 1
      %v1180 = vrot.slane %v426, 1
      %v1181 = vsel %vm722, %v1179, %v1180
      %v1182 = vrot.slane %v427, 1
      %v1183 = vrot.slane %v428, 1
      %v1184 = vsel %vm722, %v1182, %v1183
      %v1185 = vrot.slane %v429, 1
      %v1186 = vrot.slane %v430, 1
      %v1187 = vsel %vm722, %v1185, %v1186
      %v1188 = vrot.slane %v431, 1
      %v1189 = vrot.slane %v432, 1
      %v1190 = vsel %vm722, %v1188, %v1189
      %v1191 = vrot.slane %v433, 1
      %v1192 = vrot.slane %v434, 1
      %v1193 = vsel %vm722, %v1191, %v1192
      %v1194 = vrot.slane %v435, 1
      %v1195 = vrot.slane %v436, 1
      %v1196 = vsel %vm722, %v1194, %v1195
      %s1197 = scalar_lea.vmem %s4, 20
      %v1198 = vld [vmem:[%s1197] sm:$0xf]
      %v1199 = vsel %vm448, %v1175, 0
      %v1201 = vsel %vm448, %v1178, 0
      %v1203 = vsel %vm448, %v1181, 0
      %v1205 = vsel %vm448, %v1184, 0
      %v1207 = vsel %vm448, %v1187, 0
      %v1209 = vsel %vm448, %v1190, 0
      %v1211 = vsel %vm448, %v1193, 0
      %v1213 = vsel %vm448, %v1196, 0
      %v1216 = vsel %vm473, %v1198, 0
      %1218 = vmatprep.subr.mxu0 0.0
      %1219 = vmatpush1.msra.mxu0 %v1216
      %1220 = vmatprep.subr.mxu0 0.0
      %1221 = vmatpush1.msra.mxu0 0.0
      %1222 = vmatprep.subr.mxu0 0.0
      %1223 = vmatpush1.msra.mxu0 0.0
      %1224 = vmatprep.subr.mxu0 0.0
      %1225 = vmatpush1.msra.mxu0 0.0
      %1226 = vmatprep.subr.mxu0 0.0
      %1227 = vmatpush1.msra.mxu0 0.0
      %1228 = vmatprep.subr.mxu0 0.0
      %1229 = vmatpush1.msra.mxu0 0.0
      %1230 = vmatprep.subr.mxu0 0.0
      %1231 = vmatpush1.msra.mxu0 0.0
      %1232 = vmatprep.subr.mxu0 0.0
      %1233 = vmatpush1.msra.mxu0 0.0
      %1234 = vmatprep.subr.mxu0 0.0
      %1235 = vmatpush1.msra.mxu0 0.0
      %1236 = vmatprep.subr.mxu0 0.0
      %1237 = vmatpush1.msra.mxu0 0.0
      %1238 = vmatprep.subr.mxu0 0.0
      %1239 = vmatpush1.msra.mxu0 0.0
      %1240 = vmatprep.subr.mxu0 0.0
      %1241 = vmatpush1.msra.mxu0 0.0
      %1242 = vmatprep.subr.mxu0 0.0
      %1243 = vmatpush1.msra.mxu0 0.0
      %1244 = vmatprep.subr.mxu0 0.0
      %1245 = vmatpush1.msra.mxu0 0.0
      %1246 = vmatprep.subr.mxu0 0.0
      %1247 = vmatpush1.msra.mxu0 0.0
      %1248 = vmatprep.subr.mxu0 0.0
      %1249 = vmatpush1.msra.mxu0 0.0
      %1250 = vmatprep.subr.mxu0 0.0
      %1251 = vmatpush1.msra.mxu0 0.0
      %1252 = vmatprep.subr.mxu0 0.0
      %1253 = vmatpush1.msra.mxu0 0.0
      %1254 = vmatprep.subr.mxu0 0.0
      %1255 = vmatpush1.msra.mxu0 0.0
      %1256 = vmatprep.subr.mxu0 0.0
      %1257 = vmatpush1.msra.mxu0 0.0
      %1258 = vmatprep.subr.mxu0 0.0
      %1259 = vmatpush1.msra.mxu0 0.0
      %1260 = vmatprep.subr.mxu0 0.0
      %1261 = vmatpush1.msra.mxu0 0.0
      %1262 = vmatprep.subr.mxu0 0.0
      %1263 = vmatpush1.msra.mxu0 0.0
      %1264 = vmatprep.subr.mxu0 0.0
      %1265 = vmatpush1.msra.mxu0 0.0
      %1266 = vmatprep.subr.mxu0 0.0
      %1267 = vmatpush1.msra.mxu0 0.0
      %1268 = vmatprep.subr.mxu0 0.0
      %1269 = vmatpush1.msra.mxu0 0.0
      %1270 = vmatprep.subr.mxu0 0.0
      %1271 = vmatpush1.msra.mxu0 0.0
      %1272 = vmatprep.subr.mxu0 0.0
      %1273 = vmatpush1.msra.mxu0 0.0
      %1274 = vmatprep.subr.mxu0 0.0
      %1275 = vmatpush1.msra.mxu0 0.0
      %1276 = vmatprep.subr.mxu0 0.0
      %1277 = vmatpush1.msra.mxu0 0.0
      %1278 = vmatprep.subr.mxu0 0.0
      %1279 = vmatpush1.msra.mxu0 0.0
      %1280 = vmatprep.subr.mxu0 0.0
      %1281 = vmatpush1.msra.mxu0 0.0
      %1282 = vmatprep.mubr.f32.mxu0 0.0
      %1283 = vmatmul.mubr.f32.gmra.mrb[0].mxu0 %v1199
      %v1284 = vpop.f32.mrb[0].mxu0
      %v1285 = vadd.f32 0.0, %v1284
      %v1286 = vpop.f32.mrb[0].mxu0
      %1287 = vmatprep.mubr.f32.mxu0 0.0
      %1288 = vmatmul.mubr.f32.gmra.mrb[0].mxu0 %v1201
      %v1289 = vpop.f32.mrb[0].mxu0
      %v1290 = vadd.f32 0.0, %v1289
      %v1291 = vpop.f32.mrb[0].mxu0
      %1292 = vmatprep.mubr.f32.mxu0 0.0
      %1293 = vmatmul.mubr.f32.gmra.mrb[0].mxu0 %v1203
      %v1294 = vpop.f32.mrb[0].mxu0
      %v1295 = vadd.f32 0.0, %v1294
      %v1296 = vpop.f32.mrb[0].mxu0
      %1297 = vmatprep.mubr.f32.mxu0 0.0
      %1298 = vmatmul.mubr.f32.gmra.mrb[0].mxu0 %v1205
      %v1299 = vpop.f32.mrb[0].mxu0
      %v1300 = vadd.f32 0.0, %v1299
      %v1301 = vpop.f32.mrb[0].mxu0
      %1302 = vmatprep.mubr.f32.mxu0 0.0
      %1303 = vmatmul.mubr.f32.gmra.mrb[0].mxu0 %v1207
      %v1304 = vpop.f32.mrb[0].mxu0
      %v1305 = vadd.f32 0.0, %v1304
      %v1306 = vpop.f32.mrb[0].mxu0
      %1307 = vmatprep.mubr.f32.mxu0 0.0
      %1308 = vmatmul.mubr.f32.gmra.mrb[0].mxu0 %v1209
      %v1309 = vpop.f32.mrb[0].mxu0
      %v1310 = vadd.f32 0.0, %v1309
      %v1311 = vpop.f32.mrb[0].mxu0
      %1312 = vmatprep.mubr.f32.mxu0 0.0
      %1313 = vmatmul.mubr.f32.gmra.mrb[0].mxu0 %v1211
      %v1314 = vpop.f32.mrb[0].mxu0
      %v1315 = vadd.f32 0.0, %v1314
      %v1316 = vpop.f32.mrb[0].mxu0
      %1317 = vmatprep.mubr.f32.mxu0 0.0
      %1318 = vmatmul.mubr.f32.gmra.mrb[0].mxu0 %v1213
      %v1319 = vpop.f32.mrb[0].mxu0
      %v1320 = vadd.f32 0.0, %v1319
      %v1321 = vpop.f32.mrb[0].mxu0
      %1322 = vdwg.mxu0
      %v1323 = vadd.f32 %v1157, %v1285
      %v1324 = vadd.f32 %v1158, %v1290
      %v1325 = vadd.f32 %v1159, %v1295
      %v1326 = vadd.f32 %v1160, %v1300
      %v1327 = vadd.f32 %v1161, %v1305
      %v1328 = vadd.f32 %v1162, %v1310
      %v1329 = vadd.f32 %v1163, %v1315
      %v1330 = vadd.f32 %v1164, %v1320
      %s1331 = scalar_lea.vmem %s4, 24
      %v1332 = vld [vmem:[%s1331] sm:$0xf]
      %v1334 = vsel %vm448, %v410, 0
      %v1337 = vsel %vm473, %v1332, 0
      %1339 = vmatprep.subr.mxu0 0.0
      %1340 = vmatpush1.msra.mxu0 %v1337
      %1341 = vmatprep.subr.mxu0 0.0
      %1342 = vmatpush1.msra.mxu0 0.0
      %1343 = vmatprep.subr.mxu0 0.0
      %1344 = vmatpush1.msra.mxu0 0.0
      %1345 = vmatprep.subr.mxu0 0.0
      %1346 = vmatpush1.msra.mxu0 0.0
      %1347 = vmatprep.subr.mxu0 0.0
      %1348 = vmatpush1.msra.mxu0 0.0
      %1349 = vmatprep.subr.mxu0 0.0
      %1350 = vmatpush1.msra.mxu0 0.0
      %1351 = vmatprep.subr.mxu0 0.0
      %1352 = vmatpush1.msra.mxu0 0.0
      %1353 = vmatprep.subr.mxu0 0.0
      %1354 = vmatpush1.msra.mxu0 0.0
      %1355 = vmatprep.subr.mxu0 0.0
      %1356 = vmatpush1.msra.mxu0 0.0
      %1357 = vmatprep.subr.mxu0 0.0
      %1358 = vmatpush1.msra.mxu0 0.0
      %1359 = vmatprep.subr.mxu0 0.0
      %1360 = vmatpush1.msra.mxu0 0.0
      %1361 = vmatprep.subr.mxu0 0.0
      %1362 = vmatpush1.msra.mxu0 0.0
      %1363 = vmatprep.subr.mxu0 0.0
      %1364 = vmatpush1.msra.mxu0 0.0
      %1365 = vmatprep.subr.mxu0 0.0
      %1366 = vmatpush1.msra.mxu0 0.0
      %1367 = vmatprep.subr.mxu0 0.0
      %1368 = vmatpush1.msra.mxu0 0.0
      %1369 = vmatprep.subr.mxu0 0.0
      %1370 = vmatpush1.msra.mxu0 0.0
      %1371 = vmatprep.subr.mxu0 0.0
      %1372 = vmatpush1.msra.mxu0 0.0
      %1373 = vmatprep.subr.mxu0 0.0
      %1374 = vmatpush1.msra.mxu0 0.0
      %1375 = vmatprep.subr.mxu0 0.0
      %1376 = vmatpush1.msra.mxu0 0.0
      %1377 = vmatprep.subr.mxu0 0.0
      %1378 = vmatpush1.msra.mxu0 0.0
      %1379 = vmatprep.subr.mxu0 0.0
      %1380 = vmatpush1.msra.mxu0 0.0
      %1381 = vmatprep.subr.mxu0 0.0
      %1382 = vmatpush1.msra.mxu0 0.0
      %1383 = vmatprep.subr.mxu0 0.0
      %1384 = vmatpush1.msra.mxu0 0.0
      %1385 = vmatprep.subr.mxu0 0.0
      %1386 = vmatpush1.msra.mxu0 0.0
      %1387 = vmatprep.subr.mxu0 0.0
      %1388 = vmatpush1.msra.mxu0 0.0
      %1389 = vmatprep.subr.mxu0 0.0
      %1390 = vmatpush1.msra.mxu0 0.0
      %1391 = vmatprep.subr.mxu0 0.0
      %1392 = vmatpush1.msra.mxu0 0.0
      %1393 = vmatprep.subr.mxu0 0.0
      %1394 = vmatpush1.msra.mxu0 0.0
      %1395 = vmatprep.subr.mxu0 0.0
      %1396 = vmatpush1.msra.mxu0 0.0
      %1397 = vmatprep.subr.mxu0 0.0
      %1398 = vmatpush1.msra.mxu0 0.0
      %1399 = vmatprep.subr.mxu0 0.0
      %1400 = vmatpush1.msra.mxu0 0.0
      %1401 = vmatprep.subr.mxu0 0.0
      %1402 = vmatpush1.msra.mxu0 0.0
      %1403 = vmatprep.mubr.f32.mxu0 0.0
      %1404 = vmatmul.mubr.f32.gmra.mrb[0].mxu0 %v586
      %v1405 = vpop.f32.mrb[0].mxu0
      %v1406 = vadd.f32 0.0, %v1405
      %v1407 = vpop.f32.mrb[0].mxu0
      %1408 = vmatprep.mubr.f32.mxu0 0.0
      %1409 = vmatmul.mubr.f32.gmra.mrb[0].mxu0 %v589
      %v1410 = vpop.f32.mrb[0].mxu0
      %v1411 = vadd.f32 0.0, %v1410
      %v1412 = vpop.f32.mrb[0].mxu0
      %1413 = vmatprep.mubr.f32.mxu0 0.0
      %1414 = vmatmul.mubr.f32.gmra.mrb[0].mxu0 %v592
      %v1415 = vpop.f32.mrb[0].mxu0
      %v1416 = vadd.f32 0.0, %v1415
      %v1417 = vpop.f32.mrb[0].mxu0
      %1418 = vmatprep.mubr.f32.mxu0 0.0
      %1419 = vmatmul.mubr.f32.gmra.mrb[0].mxu0 %v595
      %v1420 = vpop.f32.mrb[0].mxu0
      %v1421 = vadd.f32 0.0, %v1420
      %v1422 = vpop.f32.mrb[0].mxu0
      %1423 = vmatprep.mubr.f32.mxu0 0.0
      %1424 = vmatmul.mubr.f32.gmra.mrb[0].mxu0 %v598
      %v1425 = vpop.f32.mrb[0].mxu0
      %v1426 = vadd.f32 0.0, %v1425
      %v1427 = vpop.f32.mrb[0].mxu0
      %1428 = vmatprep.mubr.f32.mxu0 0.0
      %1429 = vmatmul.mubr.f32.gmra.mrb[0].mxu0 %v601
      %v1430 = vpop.f32.mrb[0].mxu0
      %v1431 = vadd.f32 0.0, %v1430
      %v1432 = vpop.f32.mrb[0].mxu0
      %1433 = vmatprep.mubr.f32.mxu0 0.0
      %1434 = vmatmul.mubr.f32.gmra.mrb[0].mxu0 %v604
      %v1435 = vpop.f32.mrb[0].mxu0
      %v1436 = vadd.f32 0.0, %v1435
      %v1437 = vpop.f32.mrb[0].mxu0
      %1438 = vmatprep.mubr.f32.mxu0 0.0
      %1439 = vmatmul.mubr.f32.gmra.mrb[0].mxu0 %v1334
      %v1440 = vpop.f32.mrb[0].mxu0
      %v1441 = vadd.f32 0.0, %v1440
      %v1442 = vpop.f32.mrb[0].mxu0
      %1443 = vdwg.mxu0
      %v1444 = vadd.f32 %v1323, %v1406
      %v1445 = vadd.f32 %v1324, %v1411
      %v1446 = vadd.f32 %v1325, %v1416
      %v1447 = vadd.f32 %v1326, %v1421
      %v1448 = vadd.f32 %v1327, %v1426
      %v1449 = vadd.f32 %v1328, %v1431
      %v1450 = vadd.f32 %v1329, %v1436
      %v1451 = vadd.f32 %v1330, %v1441
      %s1452 = scalar_lea.vmem %s4, 28
      %v1453 = vld [vmem:[%s1452] sm:$0xf]
      %v1455 = vsel %vm448, %v420, 0
      %v1458 = vsel %vm473, %v1453, 0
      %1460 = vmatprep.subr.mxu0 0.0
      %1461 = vmatpush1.msra.mxu0 %v1458
      %1462 = vmatprep.subr.mxu0 0.0
      %1463 = vmatpush1.msra.mxu0 0.0
      %1464 = vmatprep.subr.mxu0 0.0
      %1465 = vmatpush1.msra.mxu0 0.0
      %1466 = vmatprep.subr.mxu0 0.0
      %1467 = vmatpush1.msra.mxu0 0.0
      %1468 = vmatprep.subr.mxu0 0.0
      %1469 = vmatpush1.msra.mxu0 0.0
      %1470 = vmatprep.subr.mxu0 0.0
      %1471 = vmatpush1.msra.mxu0 0.0
      %1472 = vmatprep.subr.mxu0 0.0
      %1473 = vmatpush1.msra.mxu0 0.0
      %1474 = vmatprep.subr.mxu0 0.0
      %1475 = vmatpush1.msra.mxu0 0.0
      %1476 = vmatprep.subr.mxu0 0.0
      %1477 = vmatpush1.msra.mxu0 0.0
      %1478 = vmatprep.subr.mxu0 0.0
      %1479 = vmatpush1.msra.mxu0 0.0
      %1480 = vmatprep.subr.mxu0 0.0
      %1481 = vmatpush1.msra.mxu0 0.0
      %1482 = vmatprep.subr.mxu0 0.0
      %1483 = vmatpush1.msra.mxu0 0.0
      %1484 = vmatprep.subr.mxu0 0.0
      %1485 = vmatpush1.msra.mxu0 0.0
      %1486 = vmatprep.subr.mxu0 0.0
      %1487 = vmatpush1.msra.mxu0 0.0
      %1488 = vmatprep.subr.mxu0 0.0
      %1489 = vmatpush1.msra.mxu0 0.0
      %1490 = vmatprep.subr.mxu0 0.0
      %1491 = vmatpush1.msra.mxu0 0.0
      %1492 = vmatprep.subr.mxu0 0.0
      %1493 = vmatpush1.msra.mxu0 0.0
      %1494 = vmatprep.subr.mxu0 0.0
      %1495 = vmatpush1.msra.mxu0 0.0
      %1496 = vmatprep.subr.mxu0 0.0
      %1497 = vmatpush1.msra.mxu0 0.0
      %1498 = vmatprep.subr.mxu0 0.0
      %1499 = vmatpush1.msra.mxu0 0.0
      %1500 = vmatprep.subr.mxu0 0.0
      %1501 = vmatpush1.msra.mxu0 0.0
      %1502 = vmatprep.subr.mxu0 0.0
      %1503 = vmatpush1.msra.mxu0 0.0
      %1504 = vmatprep.subr.mxu0 0.0
      %1505 = vmatpush1.msra.mxu0 0.0
      %1506 = vmatprep.subr.mxu0 0.0
      %1507 = vmatpush1.msra.mxu0 0.0
      %1508 = vmatprep.subr.mxu0 0.0
      %1509 = vmatpush1.msra.mxu0 0.0
      %1510 = vmatprep.subr.mxu0 0.0
      %1511 = vmatpush1.msra.mxu0 0.0
      %1512 = vmatprep.subr.mxu0 0.0
      %1513 = vmatpush1.msra.mxu0 0.0
      %1514 = vmatprep.subr.mxu0 0.0
      %1515 = vmatpush1.msra.mxu0 0.0
      %1516 = vmatprep.subr.mxu0 0.0
      %1517 = vmatpush1.msra.mxu0 0.0
      %1518 = vmatprep.subr.mxu0 0.0
      %1519 = vmatpush1.msra.mxu0 0.0
      %1520 = vmatprep.subr.mxu0 0.0
      %1521 = vmatpush1.msra.mxu0 0.0
      %1522 = vmatprep.subr.mxu0 0.0
      %1523 = vmatpush1.msra.mxu0 0.0
      %1524 = vmatprep.mubr.f32.mxu0 0.0
      %1525 = vmatmul.mubr.f32.gmra.mrb[0].mxu0 %v453
      %v1526 = vpop.f32.mrb[0].mxu0
      %v1527 = vadd.f32 0.0, %v1526
      %v1528 = vpop.f32.mrb[0].mxu0
      %1529 = vmatprep.mubr.f32.mxu0 0.0
      %1530 = vmatmul.mubr.f32.gmra.mrb[0].mxu0 %v456
      %v1531 = vpop.f32.mrb[0].mxu0
      %v1532 = vadd.f32 0.0, %v1531
      %v1533 = vpop.f32.mrb[0].mxu0
      %1534 = vmatprep.mubr.f32.mxu0 0.0
      %1535 = vmatmul.mubr.f32.gmra.mrb[0].mxu0 %v459
      %v1536 = vpop.f32.mrb[0].mxu0
      %v1537 = vadd.f32 0.0, %v1536
      %v1538 = vpop.f32.mrb[0].mxu0
      %1539 = vmatprep.mubr.f32.mxu0 0.0
      %1540 = vmatmul.mubr.f32.gmra.mrb[0].mxu0 %v462
      %v1541 = vpop.f32.mrb[0].mxu0
      %v1542 = vadd.f32 0.0, %v1541
      %v1543 = vpop.f32.mrb[0].mxu0
      %1544 = vmatprep.mubr.f32.mxu0 0.0
      %1545 = vmatmul.mubr.f32.gmra.mrb[0].mxu0 %v465
      %v1546 = vpop.f32.mrb[0].mxu0
      %v1547 = vadd.f32 0.0, %v1546
      %v1548 = vpop.f32.mrb[0].mxu0
      %1549 = vmatprep.mubr.f32.mxu0 0.0
      %1550 = vmatmul.mubr.f32.gmra.mrb[0].mxu0 %v468
      %v1551 = vpop.f32.mrb[0].mxu0
      %v1552 = vadd.f32 0.0, %v1551
      %v1553 = vpop.f32.mrb[0].mxu0
      %1554 = vmatprep.mubr.f32.mxu0 0.0
      %1555 = vmatmul.mubr.f32.gmra.mrb[0].mxu0 %v471
      %v1556 = vpop.f32.mrb[0].mxu0
      %v1557 = vadd.f32 0.0, %v1556
      %v1558 = vpop.f32.mrb[0].mxu0
      %1559 = vmatprep.mubr.f32.mxu0 0.0
      %1560 = vmatmul.mubr.f32.gmra.mrb[0].mxu0 %v1455
      %v1561 = vpop.f32.mrb[0].mxu0
      %v1562 = vadd.f32 0.0, %v1561
      %v1563 = vpop.f32.mrb[0].mxu0
      %1564 = vdwg.mxu0
      %v1565 = vadd.f32 %v1444, %v1527
      %v1566 = vadd.f32 %v1445, %v1532
      %v1567 = vadd.f32 %v1446, %v1537
      %v1568 = vadd.f32 %v1447, %v1542
      %v1569 = vadd.f32 %v1448, %v1547
      %v1570 = vadd.f32 %v1449, %v1552
      %v1571 = vadd.f32 %v1450, %v1557
      %v1572 = vadd.f32 %v1451, %v1562
      %v1574 = vrot.slane %v410, 1
      %v1575 = vrot.slane %v411, 1
      %v1576 = vsel %vm722, %v1574, %v1575
      %s1577 = scalar_lea.vmem %s4, 32
      %v1578 = vld [vmem:[%s1577] sm:$0xf]
      %v1579 = vsel %vm448, %v1576, 0
      %v1582 = vsel %vm473, %v1578, 0
      %1584 = vmatprep.subr.mxu0 0.0
      %1585 = vmatpush1.msra.mxu0 %v1582
      %1586 = vmatprep.subr.mxu0 0.0
      %1587 = vmatpush1.msra.mxu0 0.0
      %1588 = vmatprep.subr.mxu0 0.0
      %1589 = vmatpush1.msra.mxu0 0.0
      %1590 = vmatprep.subr.mxu0 0.0
      %1591 = vmatpush1.msra.mxu0 0.0
      %1592 = vmatprep.subr.mxu0 0.0
      %1593 = vmatpush1.msra.mxu0 0.0
      %1594 = vmatprep.subr.mxu0 0.0
      %1595 = vmatpush1.msra.mxu0 0.0
      %1596 = vmatprep.subr.mxu0 0.0
      %1597 = vmatpush1.msra.mxu0 0.0
      %1598 = vmatprep.subr.mxu0 0.0
      %1599 = vmatpush1.msra.mxu0 0.0
      %1600 = vmatprep.subr.mxu0 0.0
      %1601 = vmatpush1.msra.mxu0 0.0
      %1602 = vmatprep.subr.mxu0 0.0
      %1603 = vmatpush1.msra.mxu0 0.0
      %1604 = vmatprep.subr.mxu0 0.0
      %1605 = vmatpush1.msra.mxu0 0.0
      %1606 = vmatprep.subr.mxu0 0.0
      %1607 = vmatpush1.msra.mxu0 0.0
      %1608 = vmatprep.subr.mxu0 0.0
      %1609 = vmatpush1.msra.mxu0 0.0
      %1610 = vmatprep.subr.mxu0 0.0
      %1611 = vmatpush1.msra.mxu0 0.0
      %1612 = vmatprep.subr.mxu0 0.0
      %1613 = vmatpush1.msra.mxu0 0.0
      %1614 = vmatprep.subr.mxu0 0.0
      %1615 = vmatpush1.msra.mxu0 0.0
      %1616 = vmatprep.subr.mxu0 0.0
      %1617 = vmatpush1.msra.mxu0 0.0
      %1618 = vmatprep.subr.mxu0 0.0
      %1619 = vmatpush1.msra.mxu0 0.0
      %1620 = vmatprep.subr.mxu0 0.0
      %1621 = vmatpush1.msra.mxu0 0.0
      %1622 = vmatprep.subr.mxu0 0.0
      %1623 = vmatpush1.msra.mxu0 0.0
      %1624 = vmatprep.subr.mxu0 0.0
      %1625 = vmatpush1.msra.mxu0 0.0
      %1626 = vmatprep.subr.mxu0 0.0
      %1627 = vmatpush1.msra.mxu0 0.0
      %1628 = vmatprep.subr.mxu0 0.0
      %1629 = vmatpush1.msra.mxu0 0.0
      %1630 = vmatprep.subr.mxu0 0.0
      %1631 = vmatpush1.msra.mxu0 0.0
      %1632 = vmatprep.subr.mxu0 0.0
      %1633 = vmatpush1.msra.mxu0 0.0
      %1634 = vmatprep.subr.mxu0 0.0
      %1635 = vmatpush1.msra.mxu0 0.0
      %1636 = vmatprep.subr.mxu0 0.0
      %1637 = vmatpush1.msra.mxu0 0.0
      %1638 = vmatprep.subr.mxu0 0.0
      %1639 = vmatpush1.msra.mxu0 0.0
      %1640 = vmatprep.subr.mxu0 0.0
      %1641 = vmatpush1.msra.mxu0 0.0
      %1642 = vmatprep.subr.mxu0 0.0
      %1643 = vmatpush1.msra.mxu0 0.0
      %1644 = vmatprep.subr.mxu0 0.0
      %1645 = vmatpush1.msra.mxu0 0.0
      %1646 = vmatprep.subr.mxu0 0.0
      %1647 = vmatpush1.msra.mxu0 0.0
      %1648 = vmatprep.mubr.f32.mxu0 0.0
      %1649 = vmatmul.mubr.f32.gmra.mrb[0].mxu0 %v751
      %v1650 = vpop.f32.mrb[0].mxu0
      %v1651 = vadd.f32 0.0, %v1650
      %v1652 = vpop.f32.mrb[0].mxu0
      %1653 = vmatprep.mubr.f32.mxu0 0.0
      %1654 = vmatmul.mubr.f32.gmra.mrb[0].mxu0 %v753
      %v1655 = vpop.f32.mrb[0].mxu0
      %v1656 = vadd.f32 0.0, %v1655
      %v1657 = vpop.f32.mrb[0].mxu0
      %1658 = vmatprep.mubr.f32.mxu0 0.0
      %1659 = vmatmul.mubr.f32.gmra.mrb[0].mxu0 %v755
      %v1660 = vpop.f32.mrb[0].mxu0
      %v1661 = vadd.f32 0.0, %v1660
      %v1662 = vpop.f32.mrb[0].mxu0
      %1663 = vmatprep.mubr.f32.mxu0 0.0
      %1664 = vmatmul.mubr.f32.gmra.mrb[0].mxu0 %v757
      %v1665 = vpop.f32.mrb[0].mxu0
      %v1666 = vadd.f32 0.0, %v1665
      %v1667 = vpop.f32.mrb[0].mxu0
      %1668 = vmatprep.mubr.f32.mxu0 0.0
      %1669 = vmatmul.mubr.f32.gmra.mrb[0].mxu0 %v759
      %v1670 = vpop.f32.mrb[0].mxu0
      %v1671 = vadd.f32 0.0, %v1670
      %v1672 = vpop.f32.mrb[0].mxu0
      %1673 = vmatprep.mubr.f32.mxu0 0.0
      %1674 = vmatmul.mubr.f32.gmra.mrb[0].mxu0 %v761
      %v1675 = vpop.f32.mrb[0].mxu0
      %v1676 = vadd.f32 0.0, %v1675
      %v1677 = vpop.f32.mrb[0].mxu0
      %1678 = vmatprep.mubr.f32.mxu0 0.0
      %1679 = vmatmul.mubr.f32.gmra.mrb[0].mxu0 %v763
      %v1680 = vpop.f32.mrb[0].mxu0
      %v1681 = vadd.f32 0.0, %v1680
      %v1682 = vpop.f32.mrb[0].mxu0
      %1683 = vmatprep.mubr.f32.mxu0 0.0
      %1684 = vmatmul.mubr.f32.gmra.mrb[0].mxu0 %v1579
      %v1685 = vpop.f32.mrb[0].mxu0
      %v1686 = vadd.f32 0.0, %v1685
      %v1687 = vpop.f32.mrb[0].mxu0
      %1688 = vdwg.mxu0
      %v1689 = vadd.f32 %v1565, %v1651
      %v1690 = vadd.f32 %v1566, %v1656
      %v1691 = vadd.f32 %v1567, %v1661
      %v1692 = vadd.f32 %v1568, %v1666
      %v1693 = vadd.f32 %v1569, %v1671
      %v1694 = vadd.f32 %v1570, %v1676
      %v1695 = vadd.f32 %v1571, %v1681
      %v1696 = vadd.f32 %v1572, %v1686
      %v1697 = vld [vmem:[%s5] sm:$0x1]
      %v1699 = vlaneseq
      %v1700 = vshrl.u32 %v1699, 7
      %v1701 = vsub.s32 0, %v1700
      %v1702 = vrot.slane %v1697, %v1701
      %v1704 = vadd.f32 %v1689, %v1702
      %v1705 = vadd.f32 %v1690, %v1702
      %v1706 = vadd.f32 %v1691, %v1702
      %v1707 = vadd.f32 %v1692, %v1702
      %v1708 = vadd.f32 %v1693, %v1702
      %v1709 = vadd.f32 %v1694, %v1702
      %v1710 = vadd.f32 %v1695, %v1702
      %v1711 = vadd.f32 %v1696, %v1702
      %v1712 = vmax.f32 %v1704, 0.0
      %v1713 = vmax.f32 %v1705, 0.0
      %v1714 = vmax.f32 %v1706, 0.0
      %v1715 = vmax.f32 %v1707, 0.0
      %v1716 = vmax.f32 %v1708, 0.0
      %v1717 = vmax.f32 %v1709, 0.0
      %v1718 = vmax.f32 %v1710, 0.0
      %v1719 = vmax.f32 %v1711, 0.0
      %v1720 = vld [vmem:[%s6] sm:$0xff]
      %v1721 = vld [vmem:[%s6 + $0x8] sm:$0xff]
      %v1722 = vld [vmem:[%s6 + $0x10] sm:$0xff]
      %v1723 = vld [vmem:[%s6 + $0x18] sm:$0xff]
      %v1724 = vld [vmem:[%s7] sm:$0x1]
      %v1726 = vlaneseq
      %v1727 = vshrl.u32 %v1726, 7
      %v1728 = vsub.s32 0, %v1727
      %v1729 = vrot.slane %v1724, %v1728
      %vm1731 = vcmask 261120
      %v1733 = vsel %vm1731, %v1712, 0
      %v1736 = vsel %vm1731, %v1713, 0
      %v1739 = vsel %vm1731, %v1714, 0
      %v1742 = vsel %vm1731, %v1715, 0
      %v1745 = vsel %vm1731, %v1716, 0
      %v1748 = vsel %vm1731, %v1717, 0
      %v1751 = vsel %vm1731, %v1718, 0
      %v1754 = vsel %vm1731, %v1719, 0
      %1756 = vmatprep.subr.mxu0 0.0
      %1757 = vmatpush1.msra.mxu0 %v1720
      %1758 = vmatprep.subr.mxu0 0.0
      %1759 = vmatpush1.msra.mxu0 %v1721
      %1760 = vmatprep.subr.mxu0 0.0
      %1761 = vmatpush1.msra.mxu0 %v1722
      %1762 = vmatprep.subr.mxu0 0.0
      %1763 = vmatpush1.msra.mxu0 %v1723
      %1764 = vmatprep.subr.mxu0 0.0
      %1765 = vmatpush1.msra.mxu0 0.0
      %1766 = vmatprep.subr.mxu0 0.0
      %1767 = vmatpush1.msra.mxu0 0.0
      %1768 = vmatprep.subr.mxu0 0.0
      %1769 = vmatpush1.msra.mxu0 0.0
      %1770 = vmatprep.subr.mxu0 0.0
      %1771 = vmatpush1.msra.mxu0 0.0
      %1772 = vmatprep.subr.mxu0 0.0
      %1773 = vmatpush1.msra.mxu0 0.0
      %1774 = vmatprep.subr.mxu0 0.0
      %1775 = vmatpush1.msra.mxu0 0.0
      %1776 = vmatprep.subr.mxu0 0.0
      %1777 = vmatpush1.msra.mxu0 0.0
      %1778 = vmatprep.subr.mxu0 0.0
      %1779 = vmatpush1.msra.mxu0 0.0
      %1780 = vmatprep.subr.mxu0 0.0
      %1781 = vmatpush1.msra.mxu0 0.0
      %1782 = vmatprep.subr.mxu0 0.0
      %1783 = vmatpush1.msra.mxu0 0.0
      %1784 = vmatprep.subr.mxu0 0.0
      %1785 = vmatpush1.msra.mxu0 0.0
      %1786 = vmatprep.subr.mxu0 0.0
      %1787 = vmatpush1.msra.mxu0 0.0
      %1788 = vmatprep.subr.mxu0 0.0
      %1789 = vmatpush1.msra.mxu0 0.0
      %1790 = vmatprep.subr.mxu0 0.0
      %1791 = vmatpush1.msra.mxu0 0.0
      %1792 = vmatprep.subr.mxu0 0.0
      %1793 = vmatpush1.msra.mxu0 0.0
      %1794 = vmatprep.subr.mxu0 0.0
      %1795 = vmatpush1.msra.mxu0 0.0
      %1796 = vmatprep.subr.mxu0 0.0
      %1797 = vmatpush1.msra.mxu0 0.0
      %1798 = vmatprep.subr.mxu0 0.0
      %1799 = vmatpush1.msra.mxu0 0.0
      %1800 = vmatprep.subr.mxu0 0.0
      %1801 = vmatpush1.msra.mxu0 0.0
      %1802 = vmatprep.subr.mxu0 0.0
      %1803 = vmatpush1.msra.mxu0 0.0
      %1804 = vmatprep.subr.mxu0 0.0
      %1805 = vmatpush1.msra.mxu0 0.0
      %1806 = vmatprep.subr.mxu0 0.0
      %1807 = vmatpush1.msra.mxu0 0.0
      %1808 = vmatprep.subr.mxu0 0.0
      %1809 = vmatpush1.msra.mxu0 0.0
      %1810 = vmatprep.subr.mxu0 0.0
      %1811 = vmatpush1.msra.mxu0 0.0
      %1812 = vmatprep.subr.mxu0 0.0
      %1813 = vmatpush1.msra.mxu0 0.0
      %1814 = vmatprep.subr.mxu0 0.0
      %1815 = vmatpush1.msra.mxu0 0.0
      %1816 = vmatprep.subr.mxu0 0.0
      %1817 = vmatpush1.msra.mxu0 0.0
      %1818 = vmatprep.subr.mxu0 0.0
      %1819 = vmatpush1.msra.mxu0 0.0
      %1820 = vmatprep.mubr.f32.mxu0 0.0
      %1821 = vmatmul.mubr.f32.gmra.mrb[0].mxu0 %v1733
      %v1822 = vpop.f32.mrb[0].mxu0
      %v1823 = vadd.f32 %v1729, %v1822
      %v1824 = vpop.f32.mrb[0].mxu0
      %1825 = vmatprep.mubr.f32.mxu0 0.0
      %1826 = vmatmul.mubr.f32.gmra.mrb[0].mxu0 %v1736
      %v1827 = vpop.f32.mrb[0].mxu0
      %v1828 = vadd.f32 %v1729, %v1827
      %v1829 = vpop.f32.mrb[0].mxu0
      %1830 = vmatprep.mubr.f32.mxu0 0.0
      %1831 = vmatmul.mubr.f32.gmra.mrb[0].mxu0 %v1739
      %v1832 = vpop.f32.mrb[0].mxu0
      %v1833 = vadd.f32 %v1729, %v1832
      %v1834 = vpop.f32.mrb[0].mxu0
      %1835 = vmatprep.mubr.f32.mxu0 0.0
      %1836 = vmatmul.mubr.f32.gmra.mrb[0].mxu0 %v1742
      %v1837 = vpop.f32.mrb[0].mxu0
      %v1838 = vadd.f32 %v1729, %v1837
      %v1839 = vpop.f32.mrb[0].mxu0
      %1840 = vmatprep.mubr.f32.mxu0 0.0
      %1841 = vmatmul.mubr.f32.gmra.mrb[0].mxu0 %v1745
      %v1842 = vpop.f32.mrb[0].mxu0
      %v1843 = vadd.f32 %v1729, %v1842
      %v1844 = vpop.f32.mrb[0].mxu0
      %1845 = vmatprep.mubr.f32.mxu0 0.0
      %1846 = vmatmul.mubr.f32.gmra.mrb[0].mxu0 %v1748
      %v1847 = vpop.f32.mrb[0].mxu0
      %v1848 = vadd.f32 %v1729, %v1847
      %v1849 = vpop.f32.mrb[0].mxu0
      %1850 = vmatprep.mubr.f32.mxu0 0.0
      %1851 = vmatmul.mubr.f32.gmra.mrb[0].mxu0 %v1751
      %v1852 = vpop.f32.mrb[0].mxu0
      %v1853 = vadd.f32 %v1729, %v1852
      %v1854 = vpop.f32.mrb[0].mxu0
      %1855 = vmatprep.mubr.f32.mxu0 0.0
      %1856 = vmatmul.mubr.f32.gmra.mrb[0].mxu0 %v1754
      %v1857 = vpop.f32.mrb[0].mxu0
      %v1858 = vadd.f32 %v1729, %v1857
      %v1859 = vpop.f32.mrb[0].mxu0
      %1860 = vdwg.mxu0
      %v1861 = vld [vmem:[%s8] sm:$0xff]
      %v1862 = vld [vmem:[%s8 + $0x8] sm:$0xff]
      %v1863 = vld [vmem:[%s8 + $0x10] sm:$0xff]
      %v1864 = vld [vmem:[%s8 + $0x18] sm:$0xff]
      %v1865 = vld [vmem:[%s8 + $0x20] sm:$0xff]
      %v1866 = vld [vmem:[%s8 + $0x28] sm:$0xff]
      %v1867 = vld [vmem:[%s8 + $0x30] sm:$0xff]
      %v1868 = vld [vmem:[%s8 + $0x38] sm:$0xff]
      %v1869 = vld [vmem:[%s8 + $0x40] sm:$0xff]
      %v1870 = vld [vmem:[%s8 + $0x48] sm:$0xff]
      %v1871 = vld [vmem:[%s8 + $0x50] sm:$0xff]
      %v1872 = vld [vmem:[%s8 + $0x58] sm:$0xff]
      %v1873 = vld [vmem:[%s8 + $0x60] sm:$0xff]
      %v1874 = vld [vmem:[%s8 + $0x68] sm:$0xff]
      %v1875 = vld [vmem:[%s8 + $0x70] sm:$0xff]
      %v1876 = vld [vmem:[%s8 + $0x78] sm:$0xff]
      %v1877 = vld [vmem:[%s8 + $0x80] sm:$0xff]
      %v1878 = vld [vmem:[%s8 + $0x88] sm:$0xff]
      %v1879 = vld [vmem:[%s8 + $0x90] sm:$0xff]
      %v1880 = vld [vmem:[%s8 + $0x98] sm:$0xff]
      %v1881 = vld [vmem:[%s8 + $0xa0] sm:$0xff]
      %v1882 = vld [vmem:[%s8 + $0xa8] sm:$0xff]
      %v1883 = vld [vmem:[%s8 + $0xb0] sm:$0xff]
      %v1884 = vld [vmem:[%s8 + $0xb8] sm:$0xff]
      %v1885 = vld [vmem:[%s8 + $0xc0] sm:$0xff]
      %v1886 = vld [vmem:[%s8 + $0xc8] sm:$0xff]
      %v1887 = vld [vmem:[%s8 + $0xd0] sm:$0xff]
      %v1888 = vld [vmem:[%s8 + $0xd8] sm:$0xff]
      %v1889 = vld [vmem:[%s8 + $0xe0] sm:$0xff]
      %v1890 = vld [vmem:[%s8 + $0xe8] sm:$0xff]
      %v1891 = vld [vmem:[%s8 + $0xf0] sm:$0xff]
      %v1892 = vld [vmem:[%s8 + $0xf8] sm:$0xff]
      %vm1893 = vcmask 523264
      %v1895 = vsel %vm1893, %v1861, 0
      %v1898 = vsel %vm1893, %v1862, 0
      %v1901 = vsel %vm1893, %v1863, 0
      %v1904 = vsel %vm1893, %v1864, 0
      %v1907 = vsel %vm1893, %v1865, 0
      %v1910 = vsel %vm1893, %v1866, 0
      %v1913 = vsel %vm1893, %v1867, 0
      %v1916 = vsel %vm1893, %v1868, 0
      %v1919 = vsel %vm1893, %v1869, 0
      %v1922 = vsel %vm1893, %v1870, 0
      %v1925 = vsel %vm1893, %v1871, 0
      %v1928 = vsel %vm1893, %v1872, 0
      %v1931 = vsel %vm1893, %v1873, 0
      %v1934 = vsel %vm1893, %v1874, 0
      %v1937 = vsel %vm1893, %v1875, 0
      %v1940 = vsel %vm1893, %v1876, 0
      %v1943 = vsel %vm1893, %v1877, 0
      %v1946 = vsel %vm1893, %v1878, 0
      %v1949 = vsel %vm1893, %v1879, 0
      %v1952 = vsel %vm1893, %v1880, 0
      %v1955 = vsel %vm1893, %v1881, 0
      %v1958 = vsel %vm1893, %v1882, 0
      %v1961 = vsel %vm1893, %v1883, 0
      %v1964 = vsel %vm1893, %v1884, 0
      %v1967 = vsel %vm1893, %v1885, 0
      %v1970 = vsel %vm1893, %v1886, 0
      %v1973 = vsel %vm1893, %v1887, 0
      %v1976 = vsel %vm1893, %v1888, 0
      %v1979 = vsel %vm1893, %v1889, 0
      %v1982 = vsel %vm1893, %v1890, 0
      %v1985 = vsel %vm1893, %v1891, 0
      %v1988 = vsel %vm1893, %v1892, 0
      %1990 = vmatprep.subr.mxu0 0.0
      %1991 = vmatpush1.msra.mxu0 %v1823
      %1992 = vmatprep.subr.mxu0 0.0
      %1993 = vmatpush1.msra.mxu0 %v1828
      %1994 = vmatprep.subr.mxu0 0.0
      %1995 = vmatpush1.msra.mxu0 %v1833
      %1996 = vmatprep.subr.mxu0 0.0
      %1997 = vmatpush1.msra.mxu0 %v1838
      %1998 = vmatprep.subr.mxu0 0.0
      %1999 = vmatpush1.msra.mxu0 %v1843
      %2000 = vmatprep.subr.mxu0 0.0
      %2001 = vmatpush1.msra.mxu0 %v1848
      %2002 = vmatprep.subr.mxu0 0.0
      %2003 = vmatpush1.msra.mxu0 %v1853
      %2004 = vmatprep.subr.mxu0 0.0
      %2005 = vmatpush1.msra.mxu0 %v1858
      %2006 = vmatprep.subr.mxu0 0.0
      %2007 = vmatpush1.msra.mxu0 0.0
      %2008 = vmatprep.subr.mxu0 0.0
      %2009 = vmatpush1.msra.mxu0 0.0
      %2010 = vmatprep.subr.mxu0 0.0
      %2011 = vmatpush1.msra.mxu0 0.0
      %2012 = vmatprep.subr.mxu0 0.0
      %2013 = vmatpush1.msra.mxu0 0.0
      %2014 = vmatprep.subr.mxu0 0.0
      %2015 = vmatpush1.msra.mxu0 0.0
      %2016 = vmatprep.subr.mxu0 0.0
      %2017 = vmatpush1.msra.mxu0 0.0
      %2018 = vmatprep.subr.mxu0 0.0
      %2019 = vmatpush1.msra.mxu0 0.0
      %2020 = vmatprep.subr.mxu0 0.0
      %2021 = vmatpush1.msra.mxu0 0.0
      %2022 = vmatprep.subr.mxu0 0.0
      %2023 = vmatpush1.msra.mxu0 0.0
      %2024 = vmatprep.subr.mxu0 0.0
      %2025 = vmatpush1.msra.mxu0 0.0
      %2026 = vmatprep.subr.mxu0 0.0
      %2027 = vmatpush1.msra.mxu0 0.0
      %2028 = vmatprep.subr.mxu0 0.0
      %2029 = vmatpush1.msra.mxu0 0.0
      %2030 = vmatprep.subr.mxu0 0.0
      %2031 = vmatpush1.msra.mxu0 0.0
      %2032 = vmatprep.subr.mxu0 0.0
      %2033 = vmatpush1.msra.mxu0 0.0
      %2034 = vmatprep.subr.mxu0 0.0
      %2035 = vmatpush1.msra.mxu0 0.0
      %2036 = vmatprep.subr.mxu0 0.0
      %2037 = vmatpush1.msra.mxu0 0.0
      %2038 = vmatprep.subr.mxu0 0.0
      %2039 = vmatpush1.msra.mxu0 0.0
      %2040 = vmatprep.subr.mxu0 0.0
      %2041 = vmatpush1.msra.mxu0 0.0
      %2042 = vmatprep.subr.mxu0 0.0
      %2043 = vmatpush1.msra.mxu0 0.0
      %2044 = vmatprep.subr.mxu0 0.0
      %2045 = vmatpush1.msra.mxu0 0.0
      %2046 = vmatprep.subr.mxu0 0.0
      %2047 = vmatpush1.msra.mxu0 0.0
      %2048 = vmatprep.subr.mxu0 0.0
      %2049 = vmatpush1.msra.mxu0 0.0
      %2050 = vmatprep.subr.mxu0 0.0
      %2051 = vmatpush1.msra.mxu0 0.0
      %2052 = vmatprep.subr.mxu0 0.0
      %2053 = vmatpush1.msra.mxu0 0.0
      %2054 = vmatprep.mubr.f32.mxu0 0.0
      %2055 = vmatmul.mubr.f32.gmra.mrb[0].mxu0 %v1895
      %v2056 = vpop.f32.mrb[0].mxu0
      %v2057 = vadd.f32 0.0, %v2056
      %v2058 = vpop.f32.mrb[0].mxu0
      %2059 = vmatprep.mubr.f32.mxu0 0.0
      %2060 = vmatmul.mubr.f32.gmra.mrb[0].mxu0 %v1898
      %v2061 = vpop.f32.mrb[0].mxu0
      %v2062 = vadd.f32 0.0, %v2061
      %v2063 = vpop.f32.mrb[0].mxu0
      %2064 = vmatprep.mubr.f32.mxu0 0.0
      %2065 = vmatmul.mubr.f32.gmra.mrb[0].mxu0 %v1901
      %v2066 = vpop.f32.mrb[0].mxu0
      %v2067 = vadd.f32 0.0, %v2066
      %v2068 = vpop.f32.mrb[0].mxu0
      %2069 = vmatprep.mubr.f32.mxu0 0.0
      %2070 = vmatmul.mubr.f32.gmra.mrb[0].mxu0 %v1904
      %v2071 = vpop.f32.mrb[0].mxu0
      %v2072 = vadd.f32 0.0, %v2071
      %v2073 = vpop.f32.mrb[0].mxu0
      %2074 = vmatprep.mubr.f32.mxu0 0.0
      %2075 = vmatmul.mubr.f32.gmra.mrb[0].mxu0 %v1907
      %v2076 = vpop.f32.mrb[0].mxu0
      %v2077 = vadd.f32 0.0, %v2076
      %v2078 = vpop.f32.mrb[0].mxu0
      %2079 = vmatprep.mubr.f32.mxu0 0.0
      %2080 = vmatmul.mubr.f32.gmra.mrb[0].mxu0 %v1910
      %v2081 = vpop.f32.mrb[0].mxu0
      %v2082 = vadd.f32 0.0, %v2081
      %v2083 = vpop.f32.mrb[0].mxu0
      %2084 = vmatprep.mubr.f32.mxu0 0.0
      %2085 = vmatmul.mubr.f32.gmra.mrb[0].mxu0 %v1913
      %v2086 = vpop.f32.mrb[0].mxu0
      %v2087 = vadd.f32 0.0, %v2086
      %v2088 = vpop.f32.mrb[0].mxu0
      %2089 = vmatprep.mubr.f32.mxu0 0.0
      %2090 = vmatmul.mubr.f32.gmra.mrb[0].mxu0 %v1916
      %v2091 = vpop.f32.mrb[0].mxu0
      %v2092 = vadd.f32 0.0, %v2091
      %v2093 = vpop.f32.mrb[0].mxu0
      %2094 = vmatprep.mubr.f32.mxu0 0.0
      %2095 = vmatmul.mubr.f32.gmra.mrb[0].mxu0 %v1919
      %v2096 = vpop.f32.mrb[0].mxu0
      %v2097 = vadd.f32 0.0, %v2096
      %v2098 = vpop.f32.mrb[0].mxu0
      %2099 = vmatprep.mubr.f32.mxu0 0.0
      %2100 = vmatmul.mubr.f32.gmra.mrb[0].mxu0 %v1922
      %v2101 = vpop.f32.mrb[0].mxu0
      %v2102 = vadd.f32 0.0, %v2101
      %v2103 = vpop.f32.mrb[0].mxu0
      %2104 = vmatprep.mubr.f32.mxu0 0.0
      %2105 = vmatmul.mubr.f32.gmra.mrb[0].mxu0 %v1925
      %v2106 = vpop.f32.mrb[0].mxu0
      %v2107 = vadd.f32 0.0, %v2106
      %v2108 = vpop.f32.mrb[0].mxu0
      %2109 = vmatprep.mubr.f32.mxu0 0.0
      %2110 = vmatmul.mubr.f32.gmra.mrb[0].mxu0 %v1928
      %v2111 = vpop.f32.mrb[0].mxu0
      %v2112 = vadd.f32 0.0, %v2111
      %v2113 = vpop.f32.mrb[0].mxu0
      %2114 = vmatprep.mubr.f32.mxu0 0.0
      %2115 = vmatmul.mubr.f32.gmra.mrb[0].mxu0 %v1931
      %v2116 = vpop.f32.mrb[0].mxu0
      %v2117 = vadd.f32 0.0, %v2116
      %v2118 = vpop.f32.mrb[0].mxu0
      %2119 = vmatprep.mubr.f32.mxu0 0.0
      %2120 = vmatmul.mubr.f32.gmra.mrb[0].mxu0 %v1934
      %v2121 = vpop.f32.mrb[0].mxu0
      %v2122 = vadd.f32 0.0, %v2121
      %v2123 = vpop.f32.mrb[0].mxu0
      %2124 = vmatprep.mubr.f32.mxu0 0.0
      %2125 = vmatmul.mubr.f32.gmra.mrb[0].mxu0 %v1937
      %v2126 = vpop.f32.mrb[0].mxu0
      %v2127 = vadd.f32 0.0, %v2126
      %v2128 = vpop.f32.mrb[0].mxu0
      %2129 = vmatprep.mubr.f32.mxu0 0.0
      %2130 = vmatmul.mubr.f32.gmra.mrb[0].mxu0 %v1940
      %v2131 = vpop.f32.mrb[0].mxu0
      %v2132 = vadd.f32 0.0, %v2131
      %v2133 = vpop.f32.mrb[0].mxu0
      %2134 = vmatprep.mubr.f32.mxu0 0.0
      %2135 = vmatmul.mubr.f32.gmra.mrb[0].mxu0 %v1943
      %v2136 = vpop.f32.mrb[0].mxu0
      %v2137 = vadd.f32 0.0, %v2136
      %v2138 = vpop.f32.mrb[0].mxu0
      %2139 = vmatprep.mubr.f32.mxu0 0.0
      %2140 = vmatmul.mubr.f32.gmra.mrb[0].mxu0 %v1946
      %v2141 = vpop.f32.mrb[0].mxu0
      %v2142 = vadd.f32 0.0, %v2141
      %v2143 = vpop.f32.mrb[0].mxu0
      %2144 = vmatprep.mubr.f32.mxu0 0.0
      %2145 = vmatmul.mubr.f32.gmra.mrb[0].mxu0 %v1949
      %v2146 = vpop.f32.mrb[0].mxu0
      %v2147 = vadd.f32 0.0, %v2146
      %v2148 = vpop.f32.mrb[0].mxu0
      %2149 = vmatprep.mubr.f32.mxu0 0.0
      %2150 = vmatmul.mubr.f32.gmra.mrb[0].mxu0 %v1952
      %v2151 = vpop.f32.mrb[0].mxu0
      %v2152 = vadd.f32 0.0, %v2151
      %v2153 = vpop.f32.mrb[0].mxu0
      %2154 = vmatprep.mubr.f32.mxu0 0.0
      %2155 = vmatmul.mubr.f32.gmra.mrb[0].mxu0 %v1955
      %v2156 = vpop.f32.mrb[0].mxu0
      %v2157 = vadd.f32 0.0, %v2156
      %v2158 = vpop.f32.mrb[0].mxu0
      %2159 = vmatprep.mubr.f32.mxu0 0.0
      %2160 = vmatmul.mubr.f32.gmra.mrb[0].mxu0 %v1958
      %v2161 = vpop.f32.mrb[0].mxu0
      %v2162 = vadd.f32 0.0, %v2161
      %v2163 = vpop.f32.mrb[0].mxu0
      %2164 = vmatprep.mubr.f32.mxu0 0.0
      %2165 = vmatmul.mubr.f32.gmra.mrb[0].mxu0 %v1961
      %v2166 = vpop.f32.mrb[0].mxu0
      %v2167 = vadd.f32 0.0, %v2166
      %v2168 = vpop.f32.mrb[0].mxu0
      %2169 = vmatprep.mubr.f32.mxu0 0.0
      %2170 = vmatmul.mubr.f32.gmra.mrb[0].mxu0 %v1964
      %v2171 = vpop.f32.mrb[0].mxu0
      %v2172 = vadd.f32 0.0, %v2171
      %v2173 = vpop.f32.mrb[0].mxu0
      %2174 = vmatprep.mubr.f32.mxu0 0.0
      %2175 = vmatmul.mubr.f32.gmra.mrb[0].mxu0 %v1967
      %v2176 = vpop.f32.mrb[0].mxu0
      %v2177 = vadd.f32 0.0, %v2176
      %v2178 = vpop.f32.mrb[0].mxu0
      %2179 = vmatprep.mubr.f32.mxu0 0.0
      %2180 = vmatmul.mubr.f32.gmra.mrb[0].mxu0 %v1970
      %v2181 = vpop.f32.mrb[0].mxu0
      %v2182 = vadd.f32 0.0, %v2181
      %v2183 = vpop.f32.mrb[0].mxu0
      %2184 = vmatprep.mubr.f32.mxu0 0.0
      %2185 = vmatmul.mubr.f32.gmra.mrb[0].mxu0 %v1973
      %v2186 = vpop.f32.mrb[0].mxu0
      %v2187 = vadd.f32 0.0, %v2186
      %v2188 = vpop.f32.mrb[0].mxu0
      %2189 = vmatprep.mubr.f32.mxu0 0.0
      %2190 = vmatmul.mubr.f32.gmra.mrb[0].mxu0 %v1976
      %v2191 = vpop.f32.mrb[0].mxu0
      %v2192 = vadd.f32 0.0, %v2191
      %v2193 = vpop.f32.mrb[0].mxu0
      %2194 = vmatprep.mubr.f32.mxu0 0.0
      %2195 = vmatmul.mubr.f32.gmra.mrb[0].mxu0 %v1979
      %v2196 = vpop.f32.mrb[0].mxu0
      %v2197 = vadd.f32 0.0, %v2196
      %v2198 = vpop.f32.mrb[0].mxu0
      %2199 = vmatprep.mubr.f32.mxu0 0.0
      %2200 = vmatmul.mubr.f32.gmra.mrb[0].mxu0 %v1982
      %v2201 = vpop.f32.mrb[0].mxu0
      %v2202 = vadd.f32 0.0, %v2201
      %v2203 = vpop.f32.mrb[0].mxu0
      %2204 = vmatprep.mubr.f32.mxu0 0.0
      %2205 = vmatmul.mubr.f32.gmra.mrb[0].mxu0 %v1985
      %v2206 = vpop.f32.mrb[0].mxu0
      %v2207 = vadd.f32 0.0, %v2206
      %v2208 = vpop.f32.mrb[0].mxu0
      %2209 = vmatprep.mubr.f32.mxu0 0.0
      %2210 = vmatmul.mubr.f32.gmra.mrb[0].mxu0 %v1988
      %v2211 = vpop.f32.mrb[0].mxu0
      %v2212 = vadd.f32 0.0, %v2211
      %v2213 = vpop.f32.mrb[0].mxu0
      %2214 = vdwg.mxu0
      %2215 = vst [vmem:[%s392] sm:$0xff] %v2057
      %2216 = vst [vmem:[%s392 + $0x8] sm:$0xff] %v2062
      %2217 = vst [vmem:[%s392 + $0x10] sm:$0xff] %v2067
      %2218 = vst [vmem:[%s392 + $0x18] sm:$0xff] %v2072
      %2219 = vst [vmem:[%s392 + $0x20] sm:$0xff] %v2077
      %2220 = vst [vmem:[%s392 + $0x28] sm:$0xff] %v2082
      %2221 = vst [vmem:[%s392 + $0x30] sm:$0xff] %v2087
      %2222 = vst [vmem:[%s392 + $0x38] sm:$0xff] %v2092
      %2223 = vst [vmem:[%s392 + $0x40] sm:$0xff] %v2097
      %2224 = vst [vmem:[%s392 + $0x48] sm:$0xff] %v2102
      %2225 = vst [vmem:[%s392 + $0x50] sm:$0xff] %v2107
      %2226 = vst [vmem:[%s392 + $0x58] sm:$0xff] %v2112
      %2227 = vst [vmem:[%s392 + $0x60] sm:$0xff] %v2117
      %2228 = vst [vmem:[%s392 + $0x68] sm:$0xff] %v2122
      %2229 = vst [vmem:[%s392 + $0x70] sm:$0xff] %v2127
      %2230 = vst [vmem:[%s392 + $0x78] sm:$0xff] %v2132
      %2231 = vst [vmem:[%s392 + $0x80] sm:$0xff] %v2137
      %2232 = vst [vmem:[%s392 + $0x88] sm:$0xff] %v2142
      %2233 = vst [vmem:[%s392 + $0x90] sm:$0xff] %v2147
      %2234 = vst [vmem:[%s392 + $0x98] sm:$0xff] %v2152
      %2235 = vst [vmem:[%s392 + $0xa0] sm:$0xff] %v2157
      %2236 = vst [vmem:[%s392 + $0xa8] sm:$0xff] %v2162
      %2237 = vst [vmem:[%s392 + $0xb0] sm:$0xff] %v2167
      %2238 = vst [vmem:[%s392 + $0xb8] sm:$0xff] %v2172
      %2239 = vst [vmem:[%s392 + $0xc0] sm:$0xff] %v2177
      %2240 = vst [vmem:[%s392 + $0xc8] sm:$0xff] %v2182
      %2241 = vst [vmem:[%s392 + $0xd0] sm:$0xff] %v2187
      %2242 = vst [vmem:[%s392 + $0xd8] sm:$0xff] %v2192
      %2243 = vst [vmem:[%s392 + $0xe0] sm:$0xff] %v2197
      %2244 = vst [vmem:[%s392 + $0xe8] sm:$0xff] %v2202
      %2245 = vst [vmem:[%s392 + $0xf0] sm:$0xff] %v2207
      %2246 = vst [vmem:[%s392 + $0xf8] sm:$0xff] %v2212
      %s2247 = smul.u32 32, %s20
      %p2248 = scmp.lt.s32.totalorder %s2247, 63
      %s2249 = scalar_select %p2248, %s2247, 63
      %s2250 = smul.addr %s2249, 8
      %s2251 = scalar_lea.vmem %s9, %s2250
      // Predicated region
      $region57: #{deeplabv3_forward.1} parent=55 // pred_check
        %p2252 = pneg %p247
      $region58: #{deeplabv3_forward.1} parent=55 // pred_check_branch
        %2254 = sbr.rel (%p2252) target = $region60
      $region59: #{deeplabv3_forward.1} parent=55 // pred_region
        %s2255 = smul.u32 32, %s20
      $region60: #{deeplabv3_forward.1} parent=55 // pred_fallthru
        _
    $region56: #{deeplabv3_forward.1} parent=5 // pred_fallthru
      _
    %p2256 = scmp.le.s32.totalorder 2, %s15
    // Predicated region
    $region61: #{deeplabv3_forward.1} parent=5 // pred_check
      %p2257 = pneg %p2256
    $region62: #{deeplabv3_forward.1} parent=5 // pred_check_branch
      %2259 = sbr.rel (%p2257) target = $region64
    $region63: #{deeplabv3_forward.1} parent=5 // pred_region
      %s2260 = ssub.s32 %s15, 2
      // Predicated region
      $region65: #{deeplabv3_forward.1} parent=63 // pred_check
        %p2261 = pneg %p253
      $region66: #{deeplabv3_forward.1} parent=63 // pred_check_branch
        %2263 = sbr.rel (%p2261) target = $region68
      $region67: #{deeplabv3_forward.1} parent=63 // pred_region
        %s2264 = smul.u32 32, %s21
        %p2265 = scmp.lt.s32.totalorder %s2264, 63
        %s2266 = scalar_select %p2265, %s2264, 63
        %s2267 = smul.addr %s2266, 8
        %s2268 = scalar_lea.vmem %s9, %s2267
      $region68: #{deeplabv3_forward.1} parent=63 // pred_fallthru
        _
    $region64: #{deeplabv3_forward.1} parent=5 // pred_fallthru
      _
  $region6: #{deeplabv3_forward.1} parent=0 // loop_footer
    %s19 = sadd.s32 1, %s15
  $region7: #{deeplabv3_forward.1} parent=0 // loop_footer_branch
    %14 = sbr.rel target = $region3
  $region8: #{deeplabv3_forward.1} parent=0 // loop_exit
    _

</llo_original>
